<compile_context>
chip_gen: v5e
topology: v5e:2x2
jax: 0.10.0
libtpu: 0.0.40
codegen_flags: <defaults>
</compile_context>

<pallas_src>
import functools

import jax
import jax.numpy as jnp
from jax import lax
from jax.experimental import pallas as pl
from jax.experimental.pallas import tpu as pltpu

_NEG = -1e30  # large finite negative: safe under exp / avoids inf-inf NaN


def _round_up(x, m):
    return (x + m - 1) // m * m


def _mha_fused_kernel(x_ref, wq_ref, bq_ref, wkv_ref, bkv_ref, wp_ref, bp_ref,
                      out_ref, k_scratch, v_scratch, *, n_heads, head_size,
                      q_block):
    # Per grid step (b, qi):
    #   x_ref:   (Tp, E)  bf16  full (padded) sequence for batch b (resident)
    #   wq_ref:  (E, E)   bf16  packed per-head Q weights (head h -> cols h*H:(h+1)*H)
    #   bq_ref:  (1, E)   f32
    #   wkv_ref: (E, 2E)  bf16  packed [K_all | V_all] weights
    #   bkv_ref: (1, 2E)  f32
    #   wp_ref:  (n_heads, H, E) bf16  output-projection rows, head-major
    #   bp_ref:  (1, E)   f32
    #   out_ref: (TQ, E)  f32
    #   k_scratch, v_scratch: (n_heads, Tp, H) bf16 VMEM, persist across qi
    qi = pl.program_id(1)
    H = head_size
    E = n_heads * H
    TQ = q_block

    # --- K/V for the whole (padded) sequence: computed once per batch element
    # with a single lane-dense (Tp, E) x (E, 2E) matmul, then stored head-major
    # so per-head reads inside the kv loop are free leading-axis indexes.
    @pl.when(qi == 0)
    def _():
        kv = jnp.dot(x_ref[...], wkv_ref[...],
                     preferred_element_type=jnp.float32) + bkv_ref[...]
        for h in range(n_heads):
            k_scratch[h] = kv[:, h * H:(h + 1) * H].astype(k_scratch.dtype)
            v_scratch[h] = kv[:, E + h * H:E + (h + 1) * H].astype(v_scratch.dtype)

    # --- Q for this query tile: sliced out of the resident full-x block
    # (no second x input stream), one lane-dense (TQ, E) x (E, E) matmul.
    q_start = pl.multiple_of(qi * TQ, TQ)
    x_q = x_ref[pl.ds(q_start, TQ), :]
    q = jnp.dot(x_q, wq_ref[...], preferred_element_type=jnp.float32) + bq_ref[...]

    scale = 1.0 / float(H) ** 0.5

    # Causal mask of the diagonal kv tile (local indices) — hoisted out of
    # both the head loop and the kv loop.
    r_loc = lax.broadcasted_iota(jnp.int32, (TQ, TQ), 0)
    c_loc = lax.broadcasted_iota(jnp.int32, (TQ, TQ), 1)
    diag_mask = c_loc <= r_loc

    acc_out = jnp.zeros((TQ, E), jnp.float32)

    for h in range(n_heads):
        # Fold the 1/sqrt(H) scale into q before the bf16 cast.
        q_h = (q[:, h * H:(h + 1) * H] * scale).astype(jnp.bfloat16)

        def kv_step(j, carry):
            m, l, acc = carry
            k_j = k_scratch[h, pl.ds(j * TQ, TQ), :]          # (TQ, H) bf16
            v_j = v_scratch[h, pl.ds(j * TQ, TQ), :]          # (TQ, H) bf16
            # s = q_h @ k_j^T without an explicit transpose.
            s = lax.dot_general(q_h, k_j, (((1,), (1,)), ((), ())),
                                preferred_element_type=jnp.float32)
            # Only the diagonal tile (j == qi) needs the causal mask.
            s = jnp.where(jnp.logical_or(j < qi, diag_mask), s, _NEG)
            m_new = jnp.maximum(m, jnp.max(s, axis=-1, keepdims=True))
            alpha = jnp.exp(m - m_new)
            p = jnp.exp(s - m_new)
            l_new = alpha * l + jnp.sum(p, axis=-1, keepdims=True)
            acc_new = alpha * acc + jnp.dot(p.astype(jnp.bfloat16), v_j,
                                            preferred_element_type=jnp.float32)
            return m_new, l_new, acc_new

        init = (jnp.full((TQ, 1), _NEG, jnp.float32),
                jnp.zeros((TQ, 1), jnp.float32),
                jnp.zeros((TQ, H), jnp.float32))
        # Structural causality: only kv tiles 0..qi are visited.
        _, l_fin, acc_h = lax.fori_loop(0, qi + 1, kv_step, init)

        o_h = acc_h * pl.reciprocal(l_fin, approx=True)        # (TQ, H) f32
        # Output projection accumulated per head (no lane-offset concat).
        acc_out = acc_out + jnp.dot(o_h.astype(jnp.bfloat16), wp_ref[h],
                                    preferred_element_type=jnp.float32)
        # dropout: identity (eval mode)

    out_ref[...] = (acc_out + bp_ref[...]).astype(out_ref.dtype)


def _last_head_attn_kernel(x_ref, wq_ref, bq_ref, wk_ref, bk_ref, attn_ref,
                           k_scratch, *, head_size, q_block):
    # Recomputes only the (T, T) softmax map of the LAST head for the LAST
    # batch element (what the module actually returns), tiled over query rows
    # so VMEM stays bounded at (TQ, Tp) per step.  K is kept in scratch.
    qi = pl.program_id(0)
    TQ = q_block
    Tp = attn_ref.shape[1]

    @pl.when(qi == 0)
    def _():
        k_scratch[...] = (jnp.dot(x_ref[...], wk_ref[...],
                                  preferred_element_type=jnp.float32)
                          + bk_ref[...]).astype(k_scratch.dtype)

    q_start = pl.multiple_of(qi * TQ, TQ)
    x_q = x_ref[pl.ds(q_start, TQ), :]
    q = jnp.dot(x_q, wq_ref[...], preferred_element_type=jnp.float32) + bq_ref[...]
    scale = 1.0 / float(head_size) ** 0.5
    q_b = (q * scale).astype(jnp.bfloat16)

    s = lax.dot_general(q_b, k_scratch[...], (((1,), (1,)), ((), ())),
                        preferred_element_type=jnp.float32)       # (TQ, Tp)
    row = lax.broadcasted_iota(jnp.int32, (TQ, Tp), 0) + qi * TQ
    col = lax.broadcasted_iota(jnp.int32, (TQ, Tp), 1)
    s = jnp.where(col <= row, s, _NEG)
    s_max = jnp.max(s, axis=-1, keepdims=True)
    p = jnp.exp(s - s_max)                                         # masked -> exactly 0
    attn_ref[...] = p * pl.reciprocal(jnp.sum(p, axis=-1, keepdims=True),
                                      approx=True)


def multi_head_attention(x, wq, bq, wk, bk, wv, bv, wp, bp, *, q_block=None):
    """x: (B, T, E); wq/wk/wv: (n_heads, E, H); bq/bk/bv: (n_heads, 1, H);
    wp: (E, E); bp: (1, E).  Returns (out (B,T,E) f32, attn (T,T) f32)."""
    B, T, E = x.shape
    n_heads, _, H = wq.shape
    assert E == n_heads * H

    if q_block is None:
        # 256 fills the 256-wide v6e/v7x MXU M dim; pass q_block=128 on v5e.
        q_block = 256 if T >= 256 else _round_up(T, 8)
    q_block = min(q_block, _round_up(T, 8))
    Tp = _round_up(T, q_block)

    # Pad the sequence so every query tile is full; causality masks the padded
    # keys automatically for all real query rows; padded output rows are
    # sliced off below.
    x_p = x if Tp == T else jnp.pad(x, ((0, 0), (0, Tp - T), (0, 0)))
    x_bf = x_p.astype(jnp.bfloat16)

    # Pack weights lane-dense (one-time repack); bf16 MXU operands, f32 biases.
    wq_all = jnp.transpose(wq, (1, 0, 2)).reshape(E, E).astype(jnp.bfloat16)
    wk_all = jnp.transpose(wk, (1, 0, 2)).reshape(E, E)
    wv_all = jnp.transpose(wv, (1, 0, 2)).reshape(E, E)
    wkv_all = jnp.concatenate([wk_all, wv_all], axis=1).astype(jnp.bfloat16)
    bq_all = bq.reshape(1, E).astype(jnp.float32)
    bkv_all = jnp.concatenate([bk.reshape(1, E), bv.reshape(1, E)],
                              axis=1).astype(jnp.float32)
    wp_heads = wp.reshape(n_heads, H, E).astype(jnp.bfloat16)   # rows per head
    bp_row = bp.reshape(1, E).astype(jnp.float32)

    kernel = functools.partial(_mha_fused_kernel, n_heads=n_heads,
                               head_size=H, q_block=q_block)

    out = pl.pallas_call(
        kernel,
        out_shape=jax.ShapeDtypeStruct((B, Tp, E), jnp.float32),
        grid=(B, Tp // q_block),
        in_specs=[
            pl.BlockSpec((None, Tp, E), lambda b, qi: (b, 0, 0)),     # x (full seq)
            pl.BlockSpec((E, E), lambda b, qi: (0, 0)),               # wq_all
            pl.BlockSpec((1, E), lambda b, qi: (0, 0)),               # bq_all
            pl.BlockSpec((E, 2 * E), lambda b, qi: (0, 0)),           # wkv_all
            pl.BlockSpec((1, 2 * E), lambda b, qi: (0, 0)),           # bkv_all
            pl.BlockSpec((n_heads, H, E), lambda b, qi: (0, 0, 0)),   # wp (head rows)
            pl.BlockSpec((1, E), lambda b, qi: (0, 0)),               # bp
        ],
        out_specs=pl.BlockSpec((None, q_block, E), lambda b, qi: (b, qi, 0)),
        scratch_shapes=[
            pltpu.VMEM((n_heads, Tp, H), jnp.bfloat16),   # K, head-major, per batch
            pltpu.VMEM((n_heads, Tp, H), jnp.bfloat16),   # V, head-major, per batch
        ],
        compiler_params=pltpu.CompilerParams(
            dimension_semantics=("parallel", "arbitrary"),
            vmem_limit_bytes=64 * 1024 * 1024),
    )(x_bf, wq_all, bq_all, wkv_all, bkv_all, wp_heads, bp_row)
    out = out[:, :T, :]

    # Follow-up kernel: only the (T, T) attention slice actually returned
    # (last head, last batch element), tiled over query rows.
    attn_kernel = functools.partial(_last_head_attn_kernel, head_size=H,
                                    q_block=q_block)
    attn = pl.pallas_call(
        attn_kernel,
        out_shape=jax.ShapeDtypeStruct((Tp, Tp), jnp.float32),
        grid=(Tp // q_block,),
        in_specs=[
            pl.BlockSpec((Tp, E), lambda qi: (0, 0)),   # x, last batch element
            pl.BlockSpec((E, H), lambda qi: (0, 0)),    # wq, last head
            pl.BlockSpec((1, H), lambda qi: (0, 0)),
            pl.BlockSpec((E, H), lambda qi: (0, 0)),    # wk, last head
            pl.BlockSpec((1, H), lambda qi: (0, 0)),
        ],
        out_specs=pl.BlockSpec((q_block, Tp), lambda qi: (qi, 0)),
        scratch_shapes=[pltpu.VMEM((Tp, H), jnp.bfloat16)],
        compiler_params=pltpu.CompilerParams(
            dimension_semantics=("arbitrary",),
            vmem_limit_bytes=64 * 1024 * 1024),
    )(x_bf[B - 1], wq[-1].astype(jnp.bfloat16),
      bq[-1].reshape(1, H).astype(jnp.float32),
      wk[-1].astype(jnp.bfloat16),
      bk[-1].reshape(1, H).astype(jnp.float32))
    attn = attn[:T, :T]

    return out, attn


def _reference(x, wq, bq, wk, bk, wv, bv, wp, bp):
    """Pure-JAX f32 reference matching the PyTorch forward (eval mode)."""
    B, T, E = x.shape
    n_heads, _, H = wq.shape
    heads, attn_last = [], None
    for h in range(n_heads):
        q = x @ wq[h] + bq[h]
        k = x @ wk[h] + bk[h]
        v = x @ wv[h] + bv[h]
        s = (q @ jnp.swapaxes(k, -1, -2)) / jnp.sqrt(jnp.float32(H))
        mask = jnp.tril(jnp.ones((T, T), dtype=bool))
        s = jnp.where(mask, s, -jnp.inf)
        p = jax.nn.softmax(s, axis=-1)
        heads.append(p @ v)
        if h == n_heads - 1:
            attn_last = p[-1]
    out = jnp.concatenate(heads, axis=-1) @ wp + bp
    return out, attn_last


if __name__ == "__main__":
    B, T, E, n_heads = 2, 8, 32, 4
    H = E // n_heads

    key = jax.random.PRNGKey(0)
    ks = jax.random.split(key, 10)
    x = jax.random.normal(ks[0], (B, T, E), dtype=jnp.float32)
    wq = 0.05 * jax.random.normal(ks[1], (n_heads, E, H), dtype=jnp.float32)
    bq = 0.05 * jax.random.normal(ks[2], (n_heads, 1, H), dtype=jnp.float32)
    wk = 0.05 * jax.random.normal(ks[3], (n_heads, E, H), dtype=jnp.float32)
    bk = 0.05 * jax.random.normal(ks[4], (n_heads, 1, H), dtype=jnp.float32)
    wv = 0.05 * jax.random.normal(ks[5], (n_heads, E, H), dtype=jnp.float32)
    bv = 0.05 * jax.random.normal(ks[6], (n_heads, 1, H), dtype=jnp.float32)
    wp = 0.05 * jax.random.normal(ks[7], (E, E), dtype=jnp.float32)
    bp = 0.05 * jax.random.normal(ks[8], (1, E), dtype=jnp.float32)

    out, attn = multi_head_attention(x, wq, bq, wk, bk, wv, bv, wp, bp)
    jax.block_until_ready((out, attn))

    ref_out, ref_attn = _reference(x, wq, bq, wk, bk, wv, bv, wp, bp)
    assert out.shape == (B, T, E) and attn.shape == (T, T)
    # bf16 MXU operands + approx reciprocal -> ~1e-3 level error vs f32 ref.
    assert jnp.allclose(out, ref_out, atol=2e-2, rtol=2e-2)
    assert jnp.allclose(attn, ref_attn, atol=2e-2, rtol=2e-2)

    print("KERNEL_OK")
</pallas_src>

<mosaic_0001>
module attributes {stable_mosaic.version = 11 : i64} {
  func.func @_mha_fused_kernel(%arg0: i32, %arg1: i32, %arg2: memref<1x8x32xbf16, #tpu.memory_space<vmem>>, %arg3: memref<32x32xbf16, #tpu.memory_space<vmem>>, %arg4: memref<1x32xf32, #tpu.memory_space<vmem>>, %arg5: memref<32x64xbf16, #tpu.memory_space<vmem>>, %arg6: memref<1x64xf32, #tpu.memory_space<vmem>>, %arg7: memref<4x8x32xbf16, #tpu.memory_space<vmem>>, %arg8: memref<1x32xf32, #tpu.memory_space<vmem>>, %arg9: memref<1x8x32xf32, #tpu.memory_space<vmem>>, %arg10: memref<4x8x8xbf16, #tpu.memory_space<vmem>>, %arg11: memref<4x8x8xbf16, #tpu.memory_space<vmem>>) attributes {dimension_semantics = [#tpu.dimension_semantics<parallel>, #tpu.dimension_semantics<arbitrary>], iteration_bounds = array<i64: 2, 1>, scalar_prefetch = 0 : i64, scratch_operands = 2 : i64, tpu.core_type = #tpu.core_type<tc>, window_params = [{transform_indices = @transform_0, window_bounds = array<i64: 1, 8, 32>}, {pipeline_mode = #tpu.pipeline_mode<synchronous>, transform_indices = @transform_1, window_bounds = array<i64: 32, 32>}, {pipeline_mode = #tpu.pipeline_mode<synchronous>, transform_indices = @transform_2, window_bounds = array<i64: 1, 32>}, {pipeline_mode = #tpu.pipeline_mode<synchronous>, transform_indices = @transform_3, window_bounds = array<i64: 32, 64>}, {pipeline_mode = #tpu.pipeline_mode<synchronous>, transform_indices = @transform_4, window_bounds = array<i64: 1, 64>}, {pipeline_mode = #tpu.pipeline_mode<synchronous>, transform_indices = @transform_5, window_bounds = array<i64: 4, 8, 32>}, {pipeline_mode = #tpu.pipeline_mode<synchronous>, transform_indices = @transform_6, window_bounds = array<i64: 1, 32>}, {transform_indices = @transform_7, window_bounds = array<i64: 1, 8, 32>}]} {
    %c0_i32 = arith.constant 0 : i32
    %0 = arith.cmpi eq, %arg1, %c0_i32 : i32
    %1 = arith.extui %0 : i1 to i32
    %c0_i32_0 = arith.constant 0 : i32
    %2 = arith.cmpi ne, %1, %c0_i32_0 : i32
    scf.if %2 {
      %c0_52 = arith.constant 0 : index
      %c0_53 = arith.constant 0 : index
      %c0_54 = arith.constant 0 : index
      %99 = vector.load %arg2[%c0_52, %c0_53, %c0_54] : memref<1x8x32xbf16, #tpu.memory_space<vmem>>, vector<1x8x32xbf16>
      %100 = vector.shape_cast %99 : vector<1x8x32xbf16> to vector<8x32xbf16>
      %c0_55 = arith.constant 0 : index
      %c0_56 = arith.constant 0 : index
      %101 = vector.load %arg5[%c0_55, %c0_56] : memref<32x64xbf16, #tpu.memory_space<vmem>>, vector<32x64xbf16>
      %cst_57 = arith.constant dense<0.000000e+00> : vector<8x64xf32>
      %102 = tpu.matmul %100, %101, %cst_57 {dimension_numbers = #tpu.dot_dimension_numbers<[1], [0], [0], [1], [0, 0, 1, 1], [], []>} : vector<8x32xbf16>, vector<32x64xbf16>, vector<8x64xf32> -> vector<8x64xf32>
      %c0_58 = arith.constant 0 : index
      %c0_59 = arith.constant 0 : index
      %103 = vector.load %arg6[%c0_58, %c0_59] : memref<1x64xf32, #tpu.memory_space<vmem>>, vector<1x64xf32>
      %104 = vector.broadcast %103 : vector<1x64xf32> to vector<8x64xf32>
      %105 = arith.addf %102, %104 : vector<8x64xf32>
      %106 = vector.extract_strided_slice %105 {offsets = [0, 0], sizes = [8, 8], strides = [1, 1]} : vector<8x64xf32> to vector<8x8xf32>
      %107 = arith.truncf %106 : vector<8x8xf32> to vector<8x8xbf16>
      %c0_60 = arith.constant 0 : index
      %c0_61 = arith.constant 0 : index
      %c0_62 = arith.constant 0 : index
      %108 = vector.load %arg10[%c0_60, %c0_61, %c0_62] : memref<4x8x8xbf16, #tpu.memory_space<vmem>>, vector<1x8x8xbf16>
      %109 = vector.shape_cast %108 : vector<1x8x8xbf16> to vector<8x8xbf16>
      %110 = vector.shape_cast %107 : vector<8x8xbf16> to vector<1x8x8xbf16>
      tpu.vector_store %arg10[%c0_60, %c0_61, %c0_62], %110 {strides = array<i32>} : memref<4x8x8xbf16, #tpu.memory_space<vmem>>, vector<1x8x8xbf16>,
      %111 = vector.extract_strided_slice %105 {offsets = [0, 32], sizes = [8, 8], strides = [1, 1]} : vector<8x64xf32> to vector<8x8xf32>
      %112 = arith.truncf %111 : vector<8x8xf32> to vector<8x8xbf16>
      %c0_63 = arith.constant 0 : index
      %c0_64 = arith.constant 0 : index
      %c0_65 = arith.constant 0 : index
      %113 = vector.load %arg11[%c0_63, %c0_64, %c0_65] : memref<4x8x8xbf16, #tpu.memory_space<vmem>>, vector<1x8x8xbf16>
      %114 = vector.shape_cast %113 : vector<1x8x8xbf16> to vector<8x8xbf16>
      %115 = vector.shape_cast %112 : vector<8x8xbf16> to vector<1x8x8xbf16>
      tpu.vector_store %arg11[%c0_63, %c0_64, %c0_65], %115 {strides = array<i32>} : memref<4x8x8xbf16, #tpu.memory_space<vmem>>, vector<1x8x8xbf16>,
      %116 = vector.extract_strided_slice %105 {offsets = [0, 8], sizes = [8, 8], strides = [1, 1]} : vector<8x64xf32> to vector<8x8xf32>
      %117 = arith.truncf %116 : vector<8x8xf32> to vector<8x8xbf16>
      %c1_66 = arith.constant 1 : index
      %c0_67 = arith.constant 0 : index
      %c0_68 = arith.constant 0 : index
      %118 = vector.load %arg10[%c1_66, %c0_67, %c0_68] : memref<4x8x8xbf16, #tpu.memory_space<vmem>>, vector<1x8x8xbf16>
      %119 = vector.shape_cast %118 : vector<1x8x8xbf16> to vector<8x8xbf16>
      %120 = vector.shape_cast %117 : vector<8x8xbf16> to vector<1x8x8xbf16>
      tpu.vector_store %arg10[%c1_66, %c0_67, %c0_68], %120 {strides = array<i32>} : memref<4x8x8xbf16, #tpu.memory_space<vmem>>, vector<1x8x8xbf16>,
      %121 = vector.extract_strided_slice %105 {offsets = [0, 40], sizes = [8, 8], strides = [1, 1]} : vector<8x64xf32> to vector<8x8xf32>
      %122 = arith.truncf %121 : vector<8x8xf32> to vector<8x8xbf16>
      %c1_69 = arith.constant 1 : index
      %c0_70 = arith.constant 0 : index
      %c0_71 = arith.constant 0 : index
      %123 = vector.load %arg11[%c1_69, %c0_70, %c0_71] : memref<4x8x8xbf16, #tpu.memory_space<vmem>>, vector<1x8x8xbf16>
      %124 = vector.shape_cast %123 : vector<1x8x8xbf16> to vector<8x8xbf16>
      %125 = vector.shape_cast %122 : vector<8x8xbf16> to vector<1x8x8xbf16>
      tpu.vector_store %arg11[%c1_69, %c0_70, %c0_71], %125 {strides = array<i32>} : memref<4x8x8xbf16, #tpu.memory_space<vmem>>, vector<1x8x8xbf16>,
      %126 = vector.extract_strided_slice %105 {offsets = [0, 16], sizes = [8, 8], strides = [1, 1]} : vector<8x64xf32> to vector<8x8xf32>
      %127 = arith.truncf %126 : vector<8x8xf32> to vector<8x8xbf16>
      %c2_72 = arith.constant 2 : index
      %c0_73 = arith.constant 0 : index
      %c0_74 = arith.constant 0 : index
      %128 = vector.load %arg10[%c2_72, %c0_73, %c0_74] : memref<4x8x8xbf16, #tpu.memory_space<vmem>>, vector<1x8x8xbf16>
      %129 = vector.shape_cast %128 : vector<1x8x8xbf16> to vector<8x8xbf16>
      %130 = vector.shape_cast %127 : vector<8x8xbf16> to vector<1x8x8xbf16>
      tpu.vector_store %arg10[%c2_72, %c0_73, %c0_74], %130 {strides = array<i32>} : memref<4x8x8xbf16, #tpu.memory_space<vmem>>, vector<1x8x8xbf16>,
      %131 = vector.extract_strided_slice %105 {offsets = [0, 48], sizes = [8, 8], strides = [1, 1]} : vector<8x64xf32> to vector<8x8xf32>
      %132 = arith.truncf %131 : vector<8x8xf32> to vector<8x8xbf16>
      %c2_75 = arith.constant 2 : index
      %c0_76 = arith.constant 0 : index
      %c0_77 = arith.constant 0 : index
      %133 = vector.load %arg11[%c2_75, %c0_76, %c0_77] : memref<4x8x8xbf16, #tpu.memory_space<vmem>>, vector<1x8x8xbf16>
      %134 = vector.shape_cast %133 : vector<1x8x8xbf16> to vector<8x8xbf16>
      %135 = vector.shape_cast %132 : vector<8x8xbf16> to vector<1x8x8xbf16>
      tpu.vector_store %arg11[%c2_75, %c0_76, %c0_77], %135 {strides = array<i32>} : memref<4x8x8xbf16, #tpu.memory_space<vmem>>, vector<1x8x8xbf16>,
      %136 = vector.extract_strided_slice %105 {offsets = [0, 24], sizes = [8, 8], strides = [1, 1]} : vector<8x64xf32> to vector<8x8xf32>
      %137 = arith.truncf %136 : vector<8x8xf32> to vector<8x8xbf16>
      %c3_78 = arith.constant 3 : index
      %c0_79 = arith.constant 0 : index
      %c0_80 = arith.constant 0 : index
      %138 = vector.load %arg10[%c3_78, %c0_79, %c0_80] : memref<4x8x8xbf16, #tpu.memory_space<vmem>>, vector<1x8x8xbf16>
      %139 = vector.shape_cast %138 : vector<1x8x8xbf16> to vector<8x8xbf16>
      %140 = vector.shape_cast %137 : vector<8x8xbf16> to vector<1x8x8xbf16>
      tpu.vector_store %arg10[%c3_78, %c0_79, %c0_80], %140 {strides = array<i32>} : memref<4x8x8xbf16, #tpu.memory_space<vmem>>, vector<1x8x8xbf16>,
      %141 = vector.extract_strided_slice %105 {offsets = [0, 56], sizes = [8, 8], strides = [1, 1]} : vector<8x64xf32> to vector<8x8xf32>
      %142 = arith.truncf %141 : vector<8x8xf32> to vector<8x8xbf16>
      %c3_81 = arith.constant 3 : index
      %c0_82 = arith.constant 0 : index
      %c0_83 = arith.constant 0 : index
      %143 = vector.load %arg11[%c3_81, %c0_82, %c0_83] : memref<4x8x8xbf16, #tpu.memory_space<vmem>>, vector<1x8x8xbf16>
      %144 = vector.shape_cast %143 : vector<1x8x8xbf16> to vector<8x8xbf16>
      %145 = vector.shape_cast %142 : vector<8x8xbf16> to vector<1x8x8xbf16>
      tpu.vector_store %arg11[%c3_81, %c0_82, %c0_83], %145 {strides = array<i32>} : memref<4x8x8xbf16, #tpu.memory_space<vmem>>, vector<1x8x8xbf16>,
    } else {
    }
    %c8_i32 = arith.constant 8 : i32
    %3 = arith.muli %arg1, %c8_i32 : i32
    %4 = tpu.assume_multiple %3, 8 : i32
    %c0 = arith.constant 0 : index
    %5 = arith.index_cast %4 : i32 to index
    %c0_1 = arith.constant 0 : index
    %6 = vector.load %arg2[%c0, %5, %c0_1] : memref<1x8x32xbf16, #tpu.memory_space<vmem>>, vector<1x8x32xbf16>
    %7 = vector.shape_cast %6 : vector<1x8x32xbf16> to vector<8x32xbf16>
    %c0_2 = arith.constant 0 : index
    %c0_3 = arith.constant 0 : index
    %8 = vector.load %arg3[%c0_2, %c0_3] : memref<32x32xbf16, #tpu.memory_space<vmem>>, vector<32x32xbf16>
    %cst = arith.constant dense<0.000000e+00> : vector<8x32xf32>
    %9 = tpu.matmul %7, %8, %cst {dimension_numbers = #tpu.dot_dimension_numbers<[1], [0], [0], [1], [0, 0, 1, 1], [], []>} : vector<8x32xbf16>, vector<32x32xbf16>, vector<8x32xf32> -> vector<8x32xf32>
    %c0_4 = arith.constant 0 : index
    %c0_5 = arith.constant 0 : index
    %10 = vector.load %arg4[%c0_4, %c0_5] : memref<1x32xf32, #tpu.memory_space<vmem>>, vector<1x32xf32>
    %11 = vector.broadcast %10 : vector<1x32xf32> to vector<8x32xf32>
    %12 = arith.addf %9, %11 : vector<8x32xf32>
    %13 = tpu.iota {dimensions = array<i32: 0>} : vector<8x8xi32>
    %14 = tpu.iota {dimensions = array<i32: 1>} : vector<8x8xi32>
    %15 = arith.cmpi sle, %14, %13 : vector<8x8xi32>
    %cst_6 = arith.constant 0.000000e+00 : f32
    %16 = vector.broadcast %cst_6 : f32 to vector<8x32xf32>
    %17 = vector.extract_strided_slice %12 {offsets = [0, 0], sizes = [8, 8], strides = [1, 1]} : vector<8x32xf32> to vector<8x8xf32>
    %cst_7 = arith.constant 0.353553385 : f32
    %18 = vector.broadcast %cst_7 : f32 to vector<8x8xf32>
    %19 = arith.mulf %17, %18 : vector<8x8xf32>
    %20 = arith.truncf %19 : vector<8x8xf32> to vector<8x8xbf16>
    %cst_8 = arith.constant -1.000000e+30 : f32
    %21 = vector.broadcast %cst_8 : f32 to vector<8x1xf32>
    %cst_9 = arith.constant 0.000000e+00 : f32
    %22 = vector.broadcast %cst_9 : f32 to vector<8x1xf32>
    %cst_10 = arith.constant 0.000000e+00 : f32
    %23 = vector.broadcast %cst_10 : f32 to vector<8x8xf32>
    %c1_i32 = arith.constant 1 : i32
    %24 = arith.addi %arg1, %c1_i32 : i32
    %c0_i32_11 = arith.constant 0 : i32
    %25 = arith.subi %24, %c0_i32_11 : i32
    %26 = arith.addi %c0_i32_11, %25 : i32
    %c1_i32_12 = arith.constant 1 : i32
    %27:3 = scf.for %arg12 = %c0_i32_11 to %26 step %c1_i32_12 iter_args(%arg13 = %21, %arg14 = %22, %arg15 = %23) -> (vector<8x1xf32>, vector<8x1xf32>, vector<8x8xf32>)  : i32 {
      %c8_i32_52 = arith.constant 8 : i32
      %99 = arith.muli %arg12, %c8_i32_52 : i32
      %c0_53 = arith.constant 0 : index
      %100 = arith.index_cast %99 : i32 to index
      %c0_54 = arith.constant 0 : index
      %101 = vector.load %arg10[%c0_53, %100, %c0_54] : memref<4x8x8xbf16, #tpu.memory_space<vmem>>, vector<1x8x8xbf16>
      %102 = vector.shape_cast %101 : vector<1x8x8xbf16> to vector<8x8xbf16>
      %c8_i32_55 = arith.constant 8 : i32
      %103 = arith.muli %arg12, %c8_i32_55 : i32
      %c0_56 = arith.constant 0 : index
      %104 = arith.index_cast %103 : i32 to index
      %c0_57 = arith.constant 0 : index
      %105 = vector.load %arg11[%c0_56, %104, %c0_57] : memref<4x8x8xbf16, #tpu.memory_space<vmem>>, vector<1x8x8xbf16>
      %106 = vector.shape_cast %105 : vector<1x8x8xbf16> to vector<8x8xbf16>
      %cst_58 = arith.constant dense<0.000000e+00> : vector<8x8xf32>
      %107 = tpu.matmul %20, %102, %cst_58 {dimension_numbers = #tpu.dot_dimension_numbers<[1], [1], [0], [0], [0, 0, 1, 0], [], []>} : vector<8x8xbf16>, vector<8x8xbf16>, vector<8x8xf32> -> vector<8x8xf32>
      %108 = arith.cmpi slt, %arg12, %arg1 : i32
      %109 = vector.broadcast %108 : i1 to vector<8x8xi1>
      %110 = arith.ori %109, %15 : vector<8x8xi1>
      %cst_59 = arith.constant -1.000000e+30 : f32
      %111 = vector.broadcast %cst_59 : f32 to vector<8x8xf32>
      %112 = arith.select %110, %107, %111 : vector<8x8xi1>, vector<8x8xf32>
      %cst_60 = arith.constant dense<0xFF800000> : vector<8xf32>
      %113 = vector.multi_reduction <maximumf>, %112, %cst_60 [1] : vector<8x8xf32> to vector<8xf32>
      %114 = vector.shape_cast %113 : vector<8xf32> to vector<8x1xf32>
      %115 = arith.maximumf %arg13, %114 : vector<8x1xf32>
      %116 = arith.subf %arg13, %115 : vector<8x1xf32>
      %117 = math.exp %116 : vector<8x1xf32>
      %118 = vector.broadcast %115 : vector<8x1xf32> to vector<8x8xf32>
      %119 = arith.subf %112, %118 : vector<8x8xf32>
      %120 = math.exp %119 : vector<8x8xf32>
      %121 = arith.mulf %117, %arg14 : vector<8x1xf32>
      %cst_61 = arith.constant dense<0.000000e+00> : vector<8xf32>
      %122 = vector.multi_reduction <add>, %120, %cst_61 [1] : vector<8x8xf32> to vector<8xf32>
      %123 = vector.shape_cast %122 : vector<8xf32> to vector<8x1xf32>
      %124 = arith.addf %121, %123 : vector<8x1xf32>
      %125 = vector.broadcast %117 : vector<8x1xf32> to vector<8x8xf32>
      %126 = arith.mulf %125, %arg15 : vector<8x8xf32>
      %127 = arith.truncf %120 : vector<8x8xf32> to vector<8x8xbf16>
      %cst_62 = arith.constant dense<0.000000e+00> : vector<8x8xf32>
      %128 = tpu.matmul %127, %106, %cst_62 {dimension_numbers = #tpu.dot_dimension_numbers<[1], [0], [0], [1], [0, 0, 1, 1], [], []>} : vector<8x8xbf16>, vector<8x8xbf16>, vector<8x8xf32> -> vector<8x8xf32>
      %129 = arith.addf %126, %128 : vector<8x8xf32>
      scf.yield %115, %124, %129 : vector<8x1xf32>, vector<8x1xf32>, vector<8x8xf32>
    }
    %28 = tpu.reciprocal %27#1 {approx = true} : vector<8x1xf32> -> vector<8x1xf32>
    %29 = vector.broadcast %28 : vector<8x1xf32> to vector<8x8xf32>
    %30 = arith.mulf %27#2, %29 : vector<8x8xf32>
    %31 = arith.truncf %30 : vector<8x8xf32> to vector<8x8xbf16>
    %c0_13 = arith.constant 0 : index
    %c0_14 = arith.constant 0 : index
    %c0_15 = arith.constant 0 : index
    %32 = vector.load %arg7[%c0_13, %c0_14, %c0_15] : memref<4x8x32xbf16, #tpu.memory_space<vmem>>, vector<1x8x32xbf16>
    %33 = vector.shape_cast %32 : vector<1x8x32xbf16> to vector<8x32xbf16>
    %cst_16 = arith.constant dense<0.000000e+00> : vector<8x32xf32>
    %34 = tpu.matmul %31, %33, %cst_16 {dimension_numbers = #tpu.dot_dimension_numbers<[1], [0], [0], [1], [0, 0, 1, 1], [], []>} : vector<8x8xbf16>, vector<8x32xbf16>, vector<8x32xf32> -> vector<8x32xf32>
    %35 = arith.addf %16, %34 : vector<8x32xf32>
    %36 = vector.extract_strided_slice %12 {offsets = [0, 8], sizes = [8, 8], strides = [1, 1]} : vector<8x32xf32> to vector<8x8xf32>
    %cst_17 = arith.constant 0.353553385 : f32
    %37 = vector.broadcast %cst_17 : f32 to vector<8x8xf32>
    %38 = arith.mulf %36, %37 : vector<8x8xf32>
    %39 = arith.truncf %38 : vector<8x8xf32> to vector<8x8xbf16>
    %cst_18 = arith.constant -1.000000e+30 : f32
    %40 = vector.broadcast %cst_18 : f32 to vector<8x1xf32>
    %cst_19 = arith.constant 0.000000e+00 : f32
    %41 = vector.broadcast %cst_19 : f32 to vector<8x1xf32>
    %cst_20 = arith.constant 0.000000e+00 : f32
    %42 = vector.broadcast %cst_20 : f32 to vector<8x8xf32>
    %c1_i32_21 = arith.constant 1 : i32
    %43 = arith.addi %arg1, %c1_i32_21 : i32
    %c0_i32_22 = arith.constant 0 : i32
    %44 = arith.subi %43, %c0_i32_22 : i32
    %45 = arith.addi %c0_i32_22, %44 : i32
    %c1_i32_23 = arith.constant 1 : i32
    %46:3 = scf.for %arg12 = %c0_i32_22 to %45 step %c1_i32_23 iter_args(%arg13 = %40, %arg14 = %41, %arg15 = %42) -> (vector<8x1xf32>, vector<8x1xf32>, vector<8x8xf32>)  : i32 {
      %c8_i32_52 = arith.constant 8 : i32
      %99 = arith.muli %arg12, %c8_i32_52 : i32
      %c1_53 = arith.constant 1 : index
      %100 = arith.index_cast %99 : i32 to index
      %c0_54 = arith.constant 0 : index
      %101 = vector.load %arg10[%c1_53, %100, %c0_54] : memref<4x8x8xbf16, #tpu.memory_space<vmem>>, vector<1x8x8xbf16>
      %102 = vector.shape_cast %101 : vector<1x8x8xbf16> to vector<8x8xbf16>
      %c8_i32_55 = arith.constant 8 : i32
      %103 = arith.muli %arg12, %c8_i32_55 : i32
      %c1_56 = arith.constant 1 : index
      %104 = arith.index_cast %103 : i32 to index
      %c0_57 = arith.constant 0 : index
      %105 = vector.load %arg11[%c1_56, %104, %c0_57] : memref<4x8x8xbf16, #tpu.memory_space<vmem>>, vector<1x8x8xbf16>
      %106 = vector.shape_cast %105 : vector<1x8x8xbf16> to vector<8x8xbf16>
      %cst_58 = arith.constant dense<0.000000e+00> : vector<8x8xf32>
      %107 = tpu.matmul %39, %102, %cst_58 {dimension_numbers = #tpu.dot_dimension_numbers<[1], [1], [0], [0], [0, 0, 1, 0], [], []>} : vector<8x8xbf16>, vector<8x8xbf16>, vector<8x8xf32> -> vector<8x8xf32>
      %108 = arith.cmpi slt, %arg12, %arg1 : i32
      %109 = vector.broadcast %108 : i1 to vector<8x8xi1>
      %110 = arith.ori %109, %15 : vector<8x8xi1>
      %cst_59 = arith.constant -1.000000e+30 : f32
      %111 = vector.broadcast %cst_59 : f32 to vector<8x8xf32>
      %112 = arith.select %110, %107, %111 : vector<8x8xi1>, vector<8x8xf32>
      %cst_60 = arith.constant dense<0xFF800000> : vector<8xf32>
      %113 = vector.multi_reduction <maximumf>, %112, %cst_60 [1] : vector<8x8xf32> to vector<8xf32>
      %114 = vector.shape_cast %113 : vector<8xf32> to vector<8x1xf32>
      %115 = arith.maximumf %arg13, %114 : vector<8x1xf32>
      %116 = arith.subf %arg13, %115 : vector<8x1xf32>
      %117 = math.exp %116 : vector<8x1xf32>
      %118 = vector.broadcast %115 : vector<8x1xf32> to vector<8x8xf32>
      %119 = arith.subf %112, %118 : vector<8x8xf32>
      %120 = math.exp %119 : vector<8x8xf32>
      %121 = arith.mulf %117, %arg14 : vector<8x1xf32>
      %cst_61 = arith.constant dense<0.000000e+00> : vector<8xf32>
      %122 = vector.multi_reduction <add>, %120, %cst_61 [1] : vector<8x8xf32> to vector<8xf32>
      %123 = vector.shape_cast %122 : vector<8xf32> to vector<8x1xf32>
      %124 = arith.addf %121, %123 : vector<8x1xf32>
      %125 = vector.broadcast %117 : vector<8x1xf32> to vector<8x8xf32>
      %126 = arith.mulf %125, %arg15 : vector<8x8xf32>
      %127 = arith.truncf %120 : vector<8x8xf32> to vector<8x8xbf16>
      %cst_62 = arith.constant dense<0.000000e+00> : vector<8x8xf32>
      %128 = tpu.matmul %127, %106, %cst_62 {dimension_numbers = #tpu.dot_dimension_numbers<[1], [0], [0], [1], [0, 0, 1, 1], [], []>} : vector<8x8xbf16>, vector<8x8xbf16>, vector<8x8xf32> -> vector<8x8xf32>
      %129 = arith.addf %126, %128 : vector<8x8xf32>
      scf.yield %115, %124, %129 : vector<8x1xf32>, vector<8x1xf32>, vector<8x8xf32>
    }
    %47 = tpu.reciprocal %46#1 {approx = true} : vector<8x1xf32> -> vector<8x1xf32>
    %48 = vector.broadcast %47 : vector<8x1xf32> to vector<8x8xf32>
    %49 = arith.mulf %46#2, %48 : vector<8x8xf32>
    %50 = arith.truncf %49 : vector<8x8xf32> to vector<8x8xbf16>
    %c1 = arith.constant 1 : index
    %c0_24 = arith.constant 0 : index
    %c0_25 = arith.constant 0 : index
    %51 = vector.load %arg7[%c1, %c0_24, %c0_25] : memref<4x8x32xbf16, #tpu.memory_space<vmem>>, vector<1x8x32xbf16>
    %52 = vector.shape_cast %51 : vector<1x8x32xbf16> to vector<8x32xbf16>
    %cst_26 = arith.constant dense<0.000000e+00> : vector<8x32xf32>
    %53 = tpu.matmul %50, %52, %cst_26 {dimension_numbers = #tpu.dot_dimension_numbers<[1], [0], [0], [1], [0, 0, 1, 1], [], []>} : vector<8x8xbf16>, vector<8x32xbf16>, vector<8x32xf32> -> vector<8x32xf32>
    %54 = arith.addf %35, %53 : vector<8x32xf32>
    %55 = vector.extract_strided_slice %12 {offsets = [0, 16], sizes = [8, 8], strides = [1, 1]} : vector<8x32xf32> to vector<8x8xf32>
    %cst_27 = arith.constant 0.353553385 : f32
    %56 = vector.broadcast %cst_27 : f32 to vector<8x8xf32>
    %57 = arith.mulf %55, %56 : vector<8x8xf32>
    %58 = arith.truncf %57 : vector<8x8xf32> to vector<8x8xbf16>
    %cst_28 = arith.constant -1.000000e+30 : f32
    %59 = vector.broadcast %cst_28 : f32 to vector<8x1xf32>
    %cst_29 = arith.constant 0.000000e+00 : f32
    %60 = vector.broadcast %cst_29 : f32 to vector<8x1xf32>
    %cst_30 = arith.constant 0.000000e+00 : f32
    %61 = vector.broadcast %cst_30 : f32 to vector<8x8xf32>
    %c1_i32_31 = arith.constant 1 : i32
    %62 = arith.addi %arg1, %c1_i32_31 : i32
    %c0_i32_32 = arith.constant 0 : i32
    %63 = arith.subi %62, %c0_i32_32 : i32
    %64 = arith.addi %c0_i32_32, %63 : i32
    %c1_i32_33 = arith.constant 1 : i32
    %65:3 = scf.for %arg12 = %c0_i32_32 to %64 step %c1_i32_33 iter_args(%arg13 = %59, %arg14 = %60, %arg15 = %61) -> (vector<8x1xf32>, vector<8x1xf32>, vector<8x8xf32>)  : i32 {
      %c8_i32_52 = arith.constant 8 : i32
      %99 = arith.muli %arg12, %c8_i32_52 : i32
      %c2_53 = arith.constant 2 : index
      %100 = arith.index_cast %99 : i32 to index
      %c0_54 = arith.constant 0 : index
      %101 = vector.load %arg10[%c2_53, %100, %c0_54] : memref<4x8x8xbf16, #tpu.memory_space<vmem>>, vector<1x8x8xbf16>
      %102 = vector.shape_cast %101 : vector<1x8x8xbf16> to vector<8x8xbf16>
      %c8_i32_55 = arith.constant 8 : i32
      %103 = arith.muli %arg12, %c8_i32_55 : i32
      %c2_56 = arith.constant 2 : index
      %104 = arith.index_cast %103 : i32 to index
      %c0_57 = arith.constant 0 : index
      %105 = vector.load %arg11[%c2_56, %104, %c0_57] : memref<4x8x8xbf16, #tpu.memory_space<vmem>>, vector<1x8x8xbf16>
      %106 = vector.shape_cast %105 : vector<1x8x8xbf16> to vector<8x8xbf16>
      %cst_58 = arith.constant dense<0.000000e+00> : vector<8x8xf32>
      %107 = tpu.matmul %58, %102, %cst_58 {dimension_numbers = #tpu.dot_dimension_numbers<[1], [1], [0], [0], [0, 0, 1, 0], [], []>} : vector<8x8xbf16>, vector<8x8xbf16>, vector<8x8xf32> -> vector<8x8xf32>
      %108 = arith.cmpi slt, %arg12, %arg1 : i32
      %109 = vector.broadcast %108 : i1 to vector<8x8xi1>
      %110 = arith.ori %109, %15 : vector<8x8xi1>
      %cst_59 = arith.constant -1.000000e+30 : f32
      %111 = vector.broadcast %cst_59 : f32 to vector<8x8xf32>
      %112 = arith.select %110, %107, %111 : vector<8x8xi1>, vector<8x8xf32>
      %cst_60 = arith.constant dense<0xFF800000> : vector<8xf32>
      %113 = vector.multi_reduction <maximumf>, %112, %cst_60 [1] : vector<8x8xf32> to vector<8xf32>
      %114 = vector.shape_cast %113 : vector<8xf32> to vector<8x1xf32>
      %115 = arith.maximumf %arg13, %114 : vector<8x1xf32>
      %116 = arith.subf %arg13, %115 : vector<8x1xf32>
      %117 = math.exp %116 : vector<8x1xf32>
      %118 = vector.broadcast %115 : vector<8x1xf32> to vector<8x8xf32>
      %119 = arith.subf %112, %118 : vector<8x8xf32>
      %120 = math.exp %119 : vector<8x8xf32>
      %121 = arith.mulf %117, %arg14 : vector<8x1xf32>
      %cst_61 = arith.constant dense<0.000000e+00> : vector<8xf32>
      %122 = vector.multi_reduction <add>, %120, %cst_61 [1] : vector<8x8xf32> to vector<8xf32>
      %123 = vector.shape_cast %122 : vector<8xf32> to vector<8x1xf32>
      %124 = arith.addf %121, %123 : vector<8x1xf32>
      %125 = vector.broadcast %117 : vector<8x1xf32> to vector<8x8xf32>
      %126 = arith.mulf %125, %arg15 : vector<8x8xf32>
      %127 = arith.truncf %120 : vector<8x8xf32> to vector<8x8xbf16>
      %cst_62 = arith.constant dense<0.000000e+00> : vector<8x8xf32>
      %128 = tpu.matmul %127, %106, %cst_62 {dimension_numbers = #tpu.dot_dimension_numbers<[1], [0], [0], [1], [0, 0, 1, 1], [], []>} : vector<8x8xbf16>, vector<8x8xbf16>, vector<8x8xf32> -> vector<8x8xf32>
      %129 = arith.addf %126, %128 : vector<8x8xf32>
      scf.yield %115, %124, %129 : vector<8x1xf32>, vector<8x1xf32>, vector<8x8xf32>
    }
    %66 = tpu.reciprocal %65#1 {approx = true} : vector<8x1xf32> -> vector<8x1xf32>
    %67 = vector.broadcast %66 : vector<8x1xf32> to vector<8x8xf32>
    %68 = arith.mulf %65#2, %67 : vector<8x8xf32>
    %69 = arith.truncf %68 : vector<8x8xf32> to vector<8x8xbf16>
    %c2 = arith.constant 2 : index
    %c0_34 = arith.constant 0 : index
    %c0_35 = arith.constant 0 : index
    %70 = vector.load %arg7[%c2, %c0_34, %c0_35] : memref<4x8x32xbf16, #tpu.memory_space<vmem>>, vector<1x8x32xbf16>
    %71 = vector.shape_cast %70 : vector<1x8x32xbf16> to vector<8x32xbf16>
    %cst_36 = arith.constant dense<0.000000e+00> : vector<8x32xf32>
    %72 = tpu.matmul %69, %71, %cst_36 {dimension_numbers = #tpu.dot_dimension_numbers<[1], [0], [0], [1], [0, 0, 1, 1], [], []>} : vector<8x8xbf16>, vector<8x32xbf16>, vector<8x32xf32> -> vector<8x32xf32>
    %73 = arith.addf %54, %72 : vector<8x32xf32>
    %74 = vector.extract_strided_slice %12 {offsets = [0, 24], sizes = [8, 8], strides = [1, 1]} : vector<8x32xf32> to vector<8x8xf32>
    %cst_37 = arith.constant 0.353553385 : f32
    %75 = vector.broadcast %cst_37 : f32 to vector<8x8xf32>
    %76 = arith.mulf %74, %75 : vector<8x8xf32>
    %77 = arith.truncf %76 : vector<8x8xf32> to vector<8x8xbf16>
    %cst_38 = arith.constant -1.000000e+30 : f32
    %78 = vector.broadcast %cst_38 : f32 to vector<8x1xf32>
    %cst_39 = arith.constant 0.000000e+00 : f32
    %79 = vector.broadcast %cst_39 : f32 to vector<8x1xf32>
    %cst_40 = arith.constant 0.000000e+00 : f32
    %80 = vector.broadcast %cst_40 : f32 to vector<8x8xf32>
    %c1_i32_41 = arith.constant 1 : i32
    %81 = arith.addi %arg1, %c1_i32_41 : i32
    %c0_i32_42 = arith.constant 0 : i32
    %82 = arith.subi %81, %c0_i32_42 : i32
    %83 = arith.addi %c0_i32_42, %82 : i32
    %c1_i32_43 = arith.constant 1 : i32
    %84:3 = scf.for %arg12 = %c0_i32_42 to %83 step %c1_i32_43 iter_args(%arg13 = %78, %arg14 = %79, %arg15 = %80) -> (vector<8x1xf32>, vector<8x1xf32>, vector<8x8xf32>)  : i32 {
      %c8_i32_52 = arith.constant 8 : i32
      %99 = arith.muli %arg12, %c8_i32_52 : i32
      %c3_53 = arith.constant 3 : index
      %100 = arith.index_cast %99 : i32 to index
      %c0_54 = arith.constant 0 : index
      %101 = vector.load %arg10[%c3_53, %100, %c0_54] : memref<4x8x8xbf16, #tpu.memory_space<vmem>>, vector<1x8x8xbf16>
      %102 = vector.shape_cast %101 : vector<1x8x8xbf16> to vector<8x8xbf16>
      %c8_i32_55 = arith.constant 8 : i32
      %103 = arith.muli %arg12, %c8_i32_55 : i32
      %c3_56 = arith.constant 3 : index
      %104 = arith.index_cast %103 : i32 to index
      %c0_57 = arith.constant 0 : index
      %105 = vector.load %arg11[%c3_56, %104, %c0_57] : memref<4x8x8xbf16, #tpu.memory_space<vmem>>, vector<1x8x8xbf16>
      %106 = vector.shape_cast %105 : vector<1x8x8xbf16> to vector<8x8xbf16>
      %cst_58 = arith.constant dense<0.000000e+00> : vector<8x8xf32>
      %107 = tpu.matmul %77, %102, %cst_58 {dimension_numbers = #tpu.dot_dimension_numbers<[1], [1], [0], [0], [0, 0, 1, 0], [], []>} : vector<8x8xbf16>, vector<8x8xbf16>, vector<8x8xf32> -> vector<8x8xf32>
      %108 = arith.cmpi slt, %arg12, %arg1 : i32
      %109 = vector.broadcast %108 : i1 to vector<8x8xi1>
      %110 = arith.ori %109, %15 : vector<8x8xi1>
      %cst_59 = arith.constant -1.000000e+30 : f32
      %111 = vector.broadcast %cst_59 : f32 to vector<8x8xf32>
      %112 = arith.select %110, %107, %111 : vector<8x8xi1>, vector<8x8xf32>
      %cst_60 = arith.constant dense<0xFF800000> : vector<8xf32>
      %113 = vector.multi_reduction <maximumf>, %112, %cst_60 [1] : vector<8x8xf32> to vector<8xf32>
      %114 = vector.shape_cast %113 : vector<8xf32> to vector<8x1xf32>
      %115 = arith.maximumf %arg13, %114 : vector<8x1xf32>
      %116 = arith.subf %arg13, %115 : vector<8x1xf32>
      %117 = math.exp %116 : vector<8x1xf32>
      %118 = vector.broadcast %115 : vector<8x1xf32> to vector<8x8xf32>
      %119 = arith.subf %112, %118 : vector<8x8xf32>
      %120 = math.exp %119 : vector<8x8xf32>
      %121 = arith.mulf %117, %arg14 : vector<8x1xf32>
      %cst_61 = arith.constant dense<0.000000e+00> : vector<8xf32>
      %122 = vector.multi_reduction <add>, %120, %cst_61 [1] : vector<8x8xf32> to vector<8xf32>
      %123 = vector.shape_cast %122 : vector<8xf32> to vector<8x1xf32>
      %124 = arith.addf %121, %123 : vector<8x1xf32>
      %125 = vector.broadcast %117 : vector<8x1xf32> to vector<8x8xf32>
      %126 = arith.mulf %125, %arg15 : vector<8x8xf32>
      %127 = arith.truncf %120 : vector<8x8xf32> to vector<8x8xbf16>
      %cst_62 = arith.constant dense<0.000000e+00> : vector<8x8xf32>
      %128 = tpu.matmul %127, %106, %cst_62 {dimension_numbers = #tpu.dot_dimension_numbers<[1], [0], [0], [1], [0, 0, 1, 1], [], []>} : vector<8x8xbf16>, vector<8x8xbf16>, vector<8x8xf32> -> vector<8x8xf32>
      %129 = arith.addf %126, %128 : vector<8x8xf32>
      scf.yield %115, %124, %129 : vector<8x1xf32>, vector<8x1xf32>, vector<8x8xf32>
    }
    %85 = tpu.reciprocal %84#1 {approx = true} : vector<8x1xf32> -> vector<8x1xf32>
    %86 = vector.broadcast %85 : vector<8x1xf32> to vector<8x8xf32>
    %87 = arith.mulf %84#2, %86 : vector<8x8xf32>
    %88 = arith.truncf %87 : vector<8x8xf32> to vector<8x8xbf16>
    %c3 = arith.constant 3 : index
    %c0_44 = arith.constant 0 : index
    %c0_45 = arith.constant 0 : index
    %89 = vector.load %arg7[%c3, %c0_44, %c0_45] : memref<4x8x32xbf16, #tpu.memory_space<vmem>>, vector<1x8x32xbf16>
    %90 = vector.shape_cast %89 : vector<1x8x32xbf16> to vector<8x32xbf16>
    %cst_46 = arith.constant dense<0.000000e+00> : vector<8x32xf32>
    %91 = tpu.matmul %88, %90, %cst_46 {dimension_numbers = #tpu.dot_dimension_numbers<[1], [0], [0], [1], [0, 0, 1, 1], [], []>} : vector<8x8xbf16>, vector<8x32xbf16>, vector<8x32xf32> -> vector<8x32xf32>
    %92 = arith.addf %73, %91 : vector<8x32xf32>
    %c0_47 = arith.constant 0 : index
    %c0_48 = arith.constant 0 : index
    %93 = vector.load %arg8[%c0_47, %c0_48] : memref<1x32xf32, #tpu.memory_space<vmem>>, vector<1x32xf32>
    %94 = vector.broadcast %93 : vector<1x32xf32> to vector<8x32xf32>
    %95 = arith.addf %92, %94 : vector<8x32xf32>
    %c0_49 = arith.constant 0 : index
    %c0_50 = arith.constant 0 : index
    %c0_51 = arith.constant 0 : index
    %96 = vector.load %arg9[%c0_49, %c0_50, %c0_51] : memref<1x8x32xf32, #tpu.memory_space<vmem>>, vector<1x8x32xf32>
    %97 = vector.shape_cast %96 : vector<1x8x32xf32> to vector<8x32xf32>
    %98 = vector.shape_cast %95 : vector<8x32xf32> to vector<1x8x32xf32>
    tpu.vector_store %arg9[%c0_49, %c0_50, %c0_51], %98 {strides = array<i32>} : memref<1x8x32xf32, #tpu.memory_space<vmem>>, vector<1x8x32xf32>,
    return
  }
  func.func @transform_0(%arg0: i32, %arg1: i32) -> (i32, i32, i32) {
    %c0_i32 = arith.constant 0 : i32
    %c0_i32_0 = arith.constant 0 : i32
    %c0_i32_1 = arith.constant 0 : i32
    return %arg0, %c0_i32, %c0_i32_0 : i32, i32, i32
  }
  func.func @transform_1(%arg0: i32, %arg1: i32) -> (i32, i32) {
    %c0_i32 = arith.constant 0 : i32
    %c0_i32_0 = arith.constant 0 : i32
    %c0_i32_1 = arith.constant 0 : i32
    return %c0_i32, %c0_i32_0 : i32, i32
  }
  func.func @transform_2(%arg0: i32, %arg1: i32) -> (i32, i32) {
    %c0_i32 = arith.constant 0 : i32
    %c0_i32_0 = arith.constant 0 : i32
    %c0_i32_1 = arith.constant 0 : i32
    return %c0_i32, %c0_i32_0 : i32, i32
  }
  func.func @transform_3(%arg0: i32, %arg1: i32) -> (i32, i32) {
    %c0_i32 = arith.constant 0 : i32
    %c0_i32_0 = arith.constant 0 : i32
    %c0_i32_1 = arith.constant 0 : i32
    return %c0_i32, %c0_i32_0 : i32, i32
  }
  func.func @transform_4(%arg0: i32, %arg1: i32) -> (i32, i32) {
    %c0_i32 = arith.constant 0 : i32
    %c0_i32_0 = arith.constant 0 : i32
    %c0_i32_1 = arith.constant 0 : i32
    return %c0_i32, %c0_i32_0 : i32, i32
  }
  func.func @transform_5(%arg0: i32, %arg1: i32) -> (i32, i32, i32) {
    %c0_i32 = arith.constant 0 : i32
    %c0_i32_0 = arith.constant 0 : i32
    %c0_i32_1 = arith.constant 0 : i32
    %c0_i32_2 = arith.constant 0 : i32
    return %c0_i32, %c0_i32_0, %c0_i32_1 : i32, i32, i32
  }
  func.func @transform_6(%arg0: i32, %arg1: i32) -> (i32, i32) {
    %c0_i32 = arith.constant 0 : i32
    %c0_i32_0 = arith.constant 0 : i32
    %c0_i32_1 = arith.constant 0 : i32
    return %c0_i32, %c0_i32_0 : i32, i32
  }
  func.func @transform_7(%arg0: i32, %arg1: i32) -> (i32, i32, i32) {
    %c0_i32 = arith.constant 0 : i32
    %c0_i32_0 = arith.constant 0 : i32
    return %arg0, %arg1, %c0_i32 : i32, i32, i32
  }
}

</mosaic_0001>

<llo_original>
// kernel: tpu_custom_call.1
$region0: #{tpu_custom_call.1}
  #allocation0 [shape = 'u32[]', space=smem, size = 0x4, offset = 0x4, fixed_abs, tag = 'smem constant byte address 0x4 - core index']
  #allocation1 [shape = 'u32[72,128]{1,0:T(1,128)}', space=vmem, size = 0x9000, scoped, tag = 'internal scratch']
  #allocation2 [shape = 'bf16[4,8,8]{2,1,0:T(8,128)(2,1)}', space=vmem, size = 0x2000, scoped, tag = 'scratch operand']
  #allocation3 [shape = 'bf16[4,8,8]{2,1,0:T(8,128)(2,1)}', space=vmem, size = 0x2000, scoped, tag = 'scratch operand']
  %s0 = inlined_call_operand.hbm [shape: bf16[2,8,32], index: 0, kind: input, shape index: {}]
  %s1 = inlined_call_operand.hbm [shape: bf16[32,32], index: 1, kind: input, shape index: {}]
  %s2 = inlined_call_operand.vmem [shape: f32[1,32], index: 2, kind: input, shape index: {}]
  %s3 = inlined_call_operand.hbm [shape: bf16[32,64], index: 3, kind: input, shape index: {}]
  %s4 = inlined_call_operand.vmem [shape: f32[1,64], index: 4, kind: input, shape index: {}]
  %s5 = inlined_call_operand.hbm [shape: bf16[4,8,32], index: 5, kind: input, shape index: {}]
  %s6 = inlined_call_operand.vmem [shape: f32[1,32], index: 6, kind: input, shape index: {}]
  %s7 = inlined_call_operand.hbm [shape: f32[2,8,32], index: 7, kind: output, shape index: {}]
  %s8 = sld [smem:[#allocation0]]
  $region109: #{tpu_custom_call.1} parent=0
    _
  %s10 = ssub.s32 1, %s8
  %s11 = scalar_select 0, %s10, %s8
  $region1: #{tpu_custom_call.1} parent=0
    #allocation4 [shape = 'u8[4096]{0}', space=vmem, size = 0x1000, scoped, tag = 'input window, operand 0']
    #allocation5 [shape = 's32[2]{0}', space=sflag, size = 0x8, scoped, tag = 'scoped memory for tpu_custom_call.1']
    #allocation6 [shape = 's32[2]{0}', space=sflag, size = 0x8, scoped, tag = 'scoped memory for tpu_custom_call.1']
    #allocation7 [shape = 'u8[8192]{0}', space=vmem, size = 0x2000, scoped, tag = 'input window, operand 1, single buffered']
    #allocation8 [shape = 's32[1]{0}', space=sflag, size = 0x4, scoped, tag = 'scoped memory for tpu_custom_call.1']
    #allocation9 [shape = 'u8[8192]{0}', space=vmem, size = 0x2000, scoped, tag = 'input window, operand 3, single buffered']
    #allocation10 [shape = 'u8[8192]{0}', space=vmem, size = 0x2000, scoped, tag = 'input window, operand 5, single buffered']
    #allocation11 [shape = 's32[1]{0}', space=sflag, size = 0x4, scoped, tag = 'scoped memory for tpu_custom_call.1']
    #allocation12 [shape = 'u8[8192]{0}', space=vmem, size = 0x2000, scoped, tag = 'output window, operand 0']
    %12 = vsyncpa [#allocation5], 0
    %s13 = scalar_lea.sflag [#allocation5], 1
    %14 = vsyncpa %s13, 0
    %15 = vsyncpa [#allocation8], 0
    %16 = vsyncpa [#allocation11], 0
    %17 = vsyncpa [#allocation6], 0
    %s18 = scalar_lea.sflag [#allocation6], 1
    %19 = vsyncpa %s18, 0
    loop: start=0, step=1, limit=4
    $region2: #{tpu_custom_call.1} parent=1 // loop_pre_header
      _
    $region3: #{tpu_custom_call.1} parent=1 // loop_header
      %s21 = sphi 0, %s25
      %p22 = scmp.ge.s32.totalorder %s21, 4
      %s28 = sphi 0, %s40
      %s29 = sphi 0, %s36
      %s30 = sphi 0, %s28
      %s31 = sphi 0, %s29
      %s32 = sphi 0, %s30
      %s33 = sphi 0, %s31
      %s43 = sphi 0, %s45
      %s46 = sphi 0, %s43
      %s47 = sphi 0, %s46
      %s63 = sphi 0, %s47
      %s67 = sphi 0, %s67
      %s69 = sphi 0, %s67
      %s70 = sphi 0, %s69
      %s84 = sphi 0, %s70
      %s88 = sphi 0, %s88
      %s90 = sphi 0, %s88
      %s91 = sphi 0, %s90
      %s105 = sphi 0, %s91
      %s109 = sphi 0, %s109
      %s111 = sphi 0, %s109
      %s112 = sphi 0, %s111
      %s126 = sphi 0, %s112
      %s130 = sphi 0, %s130
      %s132 = sphi 0, %s130
      %s133 = sphi 0, %s132
      %s147 = sphi 0, %s133
      %s151 = sphi 0, %s151
      %s153 = sphi 0, %s151
      %s154 = sphi 0, %s153
      %s168 = sphi 0, %s154
      %s172 = sphi 0, %s172
      %s174 = sphi 0, %s172
      %s175 = sphi 0, %s174
      %s189 = sphi 0, %s175
      %s197 = sphi 0, %s199
      %s200 = sphi 0, %s197
      %s201 = sphi 0, %s200
      %s217 = sphi 0, %s201
    $region4: #{tpu_custom_call.1} parent=1 // loop_header_branch
      %24 = sbr.rel (%p22) target = $region8
    $region5: #{tpu_custom_call.1} parent=1 // loop_body
      %s26 = ssub.s32 %s21, 1
      %s27 = ssub.s32 %s21, 2
      %s34 = sadd.s32 1, %s29
      %p35 = scmp.ge.s32.totalorder %s34, 1
      %s36 = scalar_select %p35, 0, %s34
      %s37 = sadd.s32 1, %s28
      %s38 = scalar_select %p35, %s37, %s28
      %p39 = scmp.ge.s32.totalorder %s38, 2
      %s40 = scalar_select %p39, 0, %s38
      %s41 = ssub.s32 %s28, %s40
      %p42 = scmp.eq.s32.totalorder %s41, 0
      %s44 = sadd.s32 %s43, 1
      %s45 = scalar_select %p42, %s43, %s44
      %p48 = pneg %p42
      %p49 = scmp.eq.s32.totalorder %s21, 1
      %p50 = por %p48, %p49
      %p51 = scmp.ne.s32.totalorder %s43, %s46
      %p52 = scmp.eq.s32.totalorder %s21, 0
      %p53 = por %p51, %p52
      %p54 = scmp.ne.s32.totalorder %s43, %s46
      %p55 = scmp.eq.s32.totalorder %s26, 1
      %p56 = por %p54, %p55
      %p57 = scmp.ne.s32.totalorder %s46, %s47
      %p58 = scmp.eq.s32.totalorder %s26, 0
      %p59 = por %p57, %p58
      %p60 = scmp.ne.s32.totalorder %s46, %s47
      %p61 = scmp.eq.s32.totalorder %s27, 1
      %p62 = por %p60, %p61
      %p64 = scmp.ne.s32.totalorder %s47, %s63
      %p65 = scmp.eq.s32.totalorder %s27, 0
      %p66 = por %p64, %p65
      %s68 = sadd.s32 %s67, 1
      %p71 = scmp.eq.s32.totalorder %s21, 1
      %p72 = scmp.ne.s32.totalorder %s67, %s69
      %p73 = scmp.eq.s32.totalorder %s21, 0
      %p74 = por %p72, %p73
      %p75 = scmp.ne.s32.totalorder %s67, %s69
      %p76 = scmp.eq.s32.totalorder %s26, 1
      %p77 = por %p75, %p76
      %p78 = scmp.ne.s32.totalorder %s69, %s70
      %p79 = scmp.eq.s32.totalorder %s26, 0
      %p80 = por %p78, %p79
      %p81 = scmp.ne.s32.totalorder %s69, %s70
      %p82 = scmp.eq.s32.totalorder %s27, 1
      %p83 = por %p81, %p82
      %p85 = scmp.ne.s32.totalorder %s70, %s84
      %p86 = scmp.eq.s32.totalorder %s27, 0
      %p87 = por %p85, %p86
      %s89 = sadd.s32 %s88, 1
      %p92 = scmp.eq.s32.totalorder %s21, 1
      %p93 = scmp.ne.s32.totalorder %s88, %s90
      %p94 = scmp.eq.s32.totalorder %s21, 0
      %p95 = por %p93, %p94
      %p96 = scmp.ne.s32.totalorder %s88, %s90
      %p97 = scmp.eq.s32.totalorder %s26, 1
      %p98 = por %p96, %p97
      %p99 = scmp.ne.s32.totalorder %s90, %s91
      %p100 = scmp.eq.s32.totalorder %s26, 0
      %p101 = por %p99, %p100
      %p102 = scmp.ne.s32.totalorder %s90, %s91
      %p103 = scmp.eq.s32.totalorder %s27, 1
      %p104 = por %p102, %p103
      %p106 = scmp.ne.s32.totalorder %s91, %s105
      %p107 = scmp.eq.s32.totalorder %s27, 0
      %p108 = por %p106, %p107
      %s110 = sadd.s32 %s109, 1
      %p113 = scmp.eq.s32.totalorder %s21, 1
      %p114 = scmp.ne.s32.totalorder %s109, %s111
      %p115 = scmp.eq.s32.totalorder %s21, 0
      %p116 = por %p114, %p115
      %p117 = scmp.ne.s32.totalorder %s109, %s111
      %p118 = scmp.eq.s32.totalorder %s26, 1
      %p119 = por %p117, %p118
      %p120 = scmp.ne.s32.totalorder %s111, %s112
      %p121 = scmp.eq.s32.totalorder %s26, 0
      %p122 = por %p120, %p121
      %p123 = scmp.ne.s32.totalorder %s111, %s112
      %p124 = scmp.eq.s32.totalorder %s27, 1
      %p125 = por %p123, %p124
      %p127 = scmp.ne.s32.totalorder %s112, %s126
      %p128 = scmp.eq.s32.totalorder %s27, 0
      %p129 = por %p127, %p128
      %s131 = sadd.s32 %s130, 1
      %p134 = scmp.eq.s32.totalorder %s21, 1
      %p135 = scmp.ne.s32.totalorder %s130, %s132
      %p136 = scmp.eq.s32.totalorder %s21, 0
      %p137 = por %p135, %p136
      %p138 = scmp.ne.s32.totalorder %s130, %s132
      %p139 = scmp.eq.s32.totalorder %s26, 1
      %p140 = por %p138, %p139
      %p141 = scmp.ne.s32.totalorder %s132, %s133
      %p142 = scmp.eq.s32.totalorder %s26, 0
      %p143 = por %p141, %p142
      %p144 = scmp.ne.s32.totalorder %s132, %s133
      %p145 = scmp.eq.s32.totalorder %s27, 1
      %p146 = por %p144, %p145
      %p148 = scmp.ne.s32.totalorder %s133, %s147
      %p149 = scmp.eq.s32.totalorder %s27, 0
      %p150 = por %p148, %p149
      %s152 = sadd.s32 %s151, 1
      %p155 = scmp.eq.s32.totalorder %s21, 1
      %p156 = scmp.ne.s32.totalorder %s151, %s153
      %p157 = scmp.eq.s32.totalorder %s21, 0
      %p158 = por %p156, %p157
      %p159 = scmp.ne.s32.totalorder %s151, %s153
      %p160 = scmp.eq.s32.totalorder %s26, 1
      %p161 = por %p159, %p160
      %p162 = scmp.ne.s32.totalorder %s153, %s154
      %p163 = scmp.eq.s32.totalorder %s26, 0
      %p164 = por %p162, %p163
      %p165 = scmp.ne.s32.totalorder %s153, %s154
      %p166 = scmp.eq.s32.totalorder %s27, 1
      %p167 = por %p165, %p166
      %p169 = scmp.ne.s32.totalorder %s154, %s168
      %p170 = scmp.eq.s32.totalorder %s27, 0
      %p171 = por %p169, %p170
      %s173 = sadd.s32 %s172, 1
      %p176 = scmp.eq.s32.totalorder %s21, 1
      %p177 = scmp.ne.s32.totalorder %s172, %s174
      %p178 = scmp.eq.s32.totalorder %s21, 0
      %p179 = por %p177, %p178
      %p180 = scmp.ne.s32.totalorder %s172, %s174
      %p181 = scmp.eq.s32.totalorder %s26, 1
      %p182 = por %p180, %p181
      %p183 = scmp.ne.s32.totalorder %s174, %s175
      %p184 = scmp.eq.s32.totalorder %s26, 0
      %p185 = por %p183, %p184
      %p186 = scmp.ne.s32.totalorder %s174, %s175
      %p187 = scmp.eq.s32.totalorder %s27, 1
      %p188 = por %p186, %p187
      %p190 = scmp.ne.s32.totalorder %s175, %s189
      %p191 = scmp.eq.s32.totalorder %s27, 0
      %p192 = por %p190, %p191
      %s193 = ssub.s32 %s28, %s40
      %s194 = ssub.s32 %s29, %s36
      %s195 = sor.u32 %s193, %s194
      %p196 = scmp.eq.s32.totalorder %s195, 0
      %s198 = sadd.s32 %s197, 1
      %s199 = scalar_select %p196, %s197, %s198
      %p202 = pneg %p196
      %p203 = scmp.eq.s32.totalorder %s21, 1
      %p204 = por %p202, %p203
      %p205 = scmp.ne.s32.totalorder %s197, %s200
      %p206 = scmp.eq.s32.totalorder %s21, 0
      %p207 = por %p205, %p206
      %p208 = scmp.ne.s32.totalorder %s197, %s200
      %p209 = scmp.eq.s32.totalorder %s26, 1
      %p210 = por %p208, %p209
      %p211 = scmp.ne.s32.totalorder %s200, %s201
      %p212 = scmp.eq.s32.totalorder %s26, 0
      %p213 = por %p211, %p212
      %p214 = scmp.ne.s32.totalorder %s200, %s201
      %p215 = scmp.eq.s32.totalorder %s27, 1
      %p216 = por %p214, %p215
      %p218 = scmp.ne.s32.totalorder %s201, %s217
      %p219 = scmp.eq.s32.totalorder %s27, 0
      %p220 = por %p218, %p219
      %p221 = scmp.le.s32.totalorder 1, %s21
      %p222 = scmp.lt.s32.totalorder %s21, 3
      %p223 = pnand %p221, %p222
      %p224 = pneg %p223
      // Predicated region
      $region9: #{tpu_custom_call.1} parent=5 // pred_check
        _
      $region10: #{tpu_custom_call.1} parent=5 // pred_check_branch
        %226 = sbr.rel (%p223) target = $region12
      $region11: #{tpu_custom_call.1} parent=5 // pred_region
        %s227 = ssub.s32 %s21, 1
        // Predicated region
        $region13: #{tpu_custom_call.1} parent=11 // pred_check
          %p228 = pneg %p80
        $region14: #{tpu_custom_call.1} parent=11 // pred_check_branch
          %230 = sbr.rel (%p228) target = $region16
        $region15: #{tpu_custom_call.1} parent=11 // pred_region
          %232 = vsyncadd [#allocation8], 0
          %s233 = sshll.u32 %s1, 4
          %s234 = int_to_ptr.hbm [resolvable:$true] %s233
          %s235 = sshll.u32 [#allocation7], 4
          %s236 = int_to_ptr.vmem [resolvable:$true] %s235
          %241 = dma.hbm_to_vmem [thread:$0]  %s234, 256, %s236, [#allocation8], 64, 64, 4
        $region16: #{tpu_custom_call.1} parent=11 // pred_fallthru
          _
        // Predicated region
        $region17: #{tpu_custom_call.1} parent=11 // pred_check
          %p242 = pneg %p101
        $region18: #{tpu_custom_call.1} parent=11 // pred_check_branch
          %244 = sbr.rel (%p242) target = $region20
        $region19: #{tpu_custom_call.1} parent=11 // pred_region
          _
        $region20: #{tpu_custom_call.1} parent=11 // pred_fallthru
          _
        // Predicated region
        $region21: #{tpu_custom_call.1} parent=11 // pred_check
          %p245 = pneg %p122
        $region22: #{tpu_custom_call.1} parent=11 // pred_check_branch
          %247 = sbr.rel (%p245) target = $region24
        $region23: #{tpu_custom_call.1} parent=11 // pred_region
          %249 = vsyncadd [#allocation8], 0
          %s250 = sshll.u32 %s3, 4
          %s251 = int_to_ptr.hbm [resolvable:$true] %s250
          %s252 = sshll.u32 [#allocation9], 4
          %s253 = int_to_ptr.vmem [resolvable:$true] %s252
          %258 = dma.hbm_to_vmem [thread:$0]  %s251, 256, %s253, [#allocation8], 64, 64, 4
        $region24: #{tpu_custom_call.1} parent=11 // pred_fallthru
          _
        // Predicated region
        $region25: #{tpu_custom_call.1} parent=11 // pred_check
          %p259 = pneg %p143
        $region26: #{tpu_custom_call.1} parent=11 // pred_check_branch
          %261 = sbr.rel (%p259) target = $region28
        $region27: #{tpu_custom_call.1} parent=11 // pred_region
          _
        $region28: #{tpu_custom_call.1} parent=11 // pred_fallthru
          _
        // Predicated region
        $region29: #{tpu_custom_call.1} parent=11 // pred_check
          %p262 = pneg %p164
        $region30: #{tpu_custom_call.1} parent=11 // pred_check_branch
          %264 = sbr.rel (%p262) target = $region32
        $region31: #{tpu_custom_call.1} parent=11 // pred_region
          %266 = vsyncadd [#allocation11], 0
          %s267 = sshll.u32 %s5, 4
          %s268 = int_to_ptr.hbm [resolvable:$true] %s267
          %s269 = sshll.u32 [#allocation10], 4
          %s270 = int_to_ptr.vmem [resolvable:$true] %s269
          %275 = dma.hbm_to_vmem [thread:$0]  %s268, 256, %s270, [#allocation11], 64, 64, 4
        $region32: #{tpu_custom_call.1} parent=11 // pred_fallthru
          _
        // Predicated region
        $region33: #{tpu_custom_call.1} parent=11 // pred_check
          %p276 = pneg %p185
        $region34: #{tpu_custom_call.1} parent=11 // pred_check_branch
          %278 = sbr.rel (%p276) target = $region36
        $region35: #{tpu_custom_call.1} parent=11 // pred_region
          _
        $region36: #{tpu_custom_call.1} parent=11 // pred_fallthru
          _
      $region12: #{tpu_custom_call.1} parent=5 // pred_fallthru
        _
      %p279 = scmp.lt.s32.totalorder %s21, 2
      // Predicated region
      $region37: #{tpu_custom_call.1} parent=5 // pred_check
        %p280 = pneg %p279
      $region38: #{tpu_custom_call.1} parent=5 // pred_check_branch
        %282 = sbr.rel (%p280) target = $region40
      $region39: #{tpu_custom_call.1} parent=5 // pred_region
        // Predicated region
        $region41: #{tpu_custom_call.1} parent=39 // pred_check
          %p283 = pneg %p53
        $region42: #{tpu_custom_call.1} parent=39 // pred_check_branch
          %285 = sbr.rel (%p283) target = $region44
        $region43: #{tpu_custom_call.1} parent=39 // pred_region
          %s286 = sand.u32 %s43, 1
          %s287 = scalar_lea.sflag [#allocation5], %s286
          %s288 = sand.u32 %s43, 1
          %s289 = smul.addr %s288, 4
          %s290 = scalar_lea.vmem [#allocation4], %s289
          %292 = vsyncadd %s287, 0
          %s293 = smul.addr %s28, 4
          %s294 = scalar_lea.hbm %s0, %s293
          %s296 = sshll.u32 %s294, 4
          %s297 = int_to_ptr.hbm [resolvable:$true] %s296
          %s298 = sshll.u32 %s290, 4
          %s299 = int_to_ptr.vmem [resolvable:$true] %s298
          %301 = dma.hbm_to_vmem [thread:$0]  %s297, 64, %s299, %s287
        $region44: #{tpu_custom_call.1} parent=39 // pred_fallthru
          _
      $region40: #{tpu_custom_call.1} parent=5 // pred_fallthru
        _
      %p302 = scmp.le.s32.totalorder 1, %s21
      %p303 = scmp.lt.s32.totalorder %s21, 3
      %p304 = pnand %p302, %p303
      %p305 = pneg %p304
      // Predicated region
      $region45: #{tpu_custom_call.1} parent=5 // pred_check
        _
      $region46: #{tpu_custom_call.1} parent=5 // pred_check_branch
        %307 = sbr.rel (%p304) target = $region48
      $region47: #{tpu_custom_call.1} parent=5 // pred_region
        %s308 = ssub.s32 %s21, 1
        %s309 = sand.u32 %s46, 1
        %s310 = scalar_lea.sflag [#allocation5], %s309
        %s311 = sand.u32 %s46, 1
        %s312 = smul.addr %s311, 4
        %s313 = scalar_lea.vmem [#allocation4], %s312
        // Predicated region
        $region49: #{tpu_custom_call.1} parent=47 // pred_check
          %p314 = pneg %p59
        $region50: #{tpu_custom_call.1} parent=47 // pred_check_branch
          %316 = sbr.rel (%p314) target = $region52
        $region51: #{tpu_custom_call.1} parent=47 // pred_region
          %318 = dma.done %s310, 64
        $region52: #{tpu_custom_call.1} parent=47 // pred_fallthru
          _
        // Predicated region
        $region53: #{tpu_custom_call.1} parent=47 // pred_check
          %p319 = pneg %p80
        $region54: #{tpu_custom_call.1} parent=47 // pred_check_branch
          %321 = sbr.rel (%p319) target = $region56
        $region55: #{tpu_custom_call.1} parent=47 // pred_region
          %323 = dma.done [#allocation8], 256
        $region56: #{tpu_custom_call.1} parent=47 // pred_fallthru
          _
        // Predicated region
        $region57: #{tpu_custom_call.1} parent=47 // pred_check
          %p324 = pneg %p122
        $region58: #{tpu_custom_call.1} parent=47 // pred_check_branch
          %326 = sbr.rel (%p324) target = $region60
        $region59: #{tpu_custom_call.1} parent=47 // pred_region
          %328 = dma.done [#allocation8], 256
        $region60: #{tpu_custom_call.1} parent=47 // pred_fallthru
          _
        // Predicated region
        $region61: #{tpu_custom_call.1} parent=47 // pred_check
          %p329 = pneg %p164
        $region62: #{tpu_custom_call.1} parent=47 // pred_check_branch
          %331 = sbr.rel (%p329) target = $region64
        $region63: #{tpu_custom_call.1} parent=47 // pred_region
          %333 = dma.done [#allocation11], 256
        $region64: #{tpu_custom_call.1} parent=47 // pred_fallthru
          _
        %s334 = sand.u32 %s46, 1
        %s335 = scalar_lea.sflag [#allocation5], %s334
        %s336 = sand.u32 %s46, 1
        %s337 = smul.addr %s336, 4
        %s338 = scalar_lea.vmem [#allocation4], %s337
        %p339 = pneg %p59
        %p340 = pneg %p56
        %p341 = pneg %p80
        %p342 = pneg %p77
        %p343 = pneg %p101
        %p344 = pneg %p98
        %p345 = pneg %p122
        %p346 = pneg %p119
        %p347 = pneg %p143
        %p348 = pneg %p140
        %p349 = pneg %p164
        %p350 = pneg %p161
        %p351 = pneg %p185
        %p352 = pneg %p182
        %p353 = pneg %p213
        %p354 = pneg %p210
        %s355 = sand.u32 %s200, 1
        %s356 = scalar_lea.sflag [#allocation6], %s355
        %s357 = sand.u32 %s200, 1
        %s358 = smul.addr %s357, 8
        %s359 = scalar_lea.vmem [#allocation12], %s358
        %p361 = scmp.eq.s32.totalorder %s31, 0
        // Predicated region
        $region65: #{tpu_custom_call.1} parent=47 // pred_check
          %p362 = pneg %p361
        $region66: #{tpu_custom_call.1} parent=47 // pred_check_branch
          %364 = sbr.rel (%p362) target = $region68
        $region67: #{tpu_custom_call.1} parent=47 // pred_region
          %v365 = vld [vmem:[%s313] sm:$0xf]
          %v366 = vld [vmem:[#allocation9] sm:$0xf]
          %v367 = vld [vmem:[#allocation9 + $0x4] sm:$0xf]
          %v368 = vld [vmem:[#allocation9 + $0x8] sm:$0xf]
          %v369 = vld [vmem:[#allocation9 + $0xc] sm:$0xf]
          %v370 = vld [vmem:[%s4] sm:$0x1]
          %v372 = vperm.slane %v370, 0
          %v378 = vunpack.c.l.b16 %v366
          %v379 = vunpack.c.l.b16 %v367
          %v380 = vunpack.c.l.b16 %v368
          %v381 = vunpack.c.l.b16 %v369
          %v382 = vpack.c.b16 %v379, %v378
          %v383 = vpack.c.b16 %v381, %v380
          %vm386 = vcmask 261120
          %v388 = vsel %vm386, %v365, 0
          %390 = vmatpush.bf16.msra.mxu0 0
          %391 = vmatpush.bf16.msra.mxu0 0
          %392 = vmatpush.bf16.msra.mxu0 0
          %393 = vmatpush.bf16.msra.mxu0 0
          %394 = vmatpush.bf16.msra.mxu0 0
          %395 = vmatpush.bf16.msra.mxu0 0
          %396 = vmatpush.bf16.msra.mxu0 %v383
          %397 = vmatpush.bf16.msra.mxu0 %v382
          %398 = vmatmul.bf16.gmra.mxu0 %v388
          %v399 = vpop.f32.mrf.mxu0
          %v400 = vadd.f32 %v372, %v399
          %v401 = vpop.f32.mrf.mxu0
          %402 = vdwg.mxu0
          %v403 = vpack.c.bf16 %v400, %v400
          %vm404 = vcmask 60416
          %405 = vst.msk [vmem:[#allocation2] sm:$0xf] %vm404, %v403
          %407 = vrot.lane.b32.xlu0 %v403, 96
          %v408 = vpop.permute.xlu0 %407
          %410 = vst.msk [vmem:[#allocation3] sm:$0xf] %vm404, %v408
          %411 = vrot.lane.b32.xlu0 %v403, 120
          %v412 = vpop.permute.xlu0 %411
          %s414 = scalar_lea.vmem [#allocation2], 4
          %415 = vst.msk [vmem:[%s414] sm:$0xf] %vm404, %v412
          %416 = vrot.lane.b32.xlu0 %v403, 88
          %v417 = vpop.permute.xlu0 %416
          %s419 = scalar_lea.vmem [#allocation3], 4
          %420 = vst.msk [vmem:[%s419] sm:$0xf] %vm404, %v417
          %421 = vrot.lane.b32.xlu0 %v403, 112
          %v422 = vpop.permute.xlu0 %421
          %s424 = scalar_lea.vmem [#allocation2], 8
          %425 = vst.msk [vmem:[%s424] sm:$0xf] %vm404, %v422
          %426 = vrot.lane.b32.xlu0 %v403, 80
          %v427 = vpop.permute.xlu0 %426
          %s429 = scalar_lea.vmem [#allocation3], 8
          %430 = vst.msk [vmem:[%s429] sm:$0xf] %vm404, %v427
          %431 = vrot.lane.b32.xlu0 %v403, 104
          %v432 = vpop.permute.xlu0 %431
          %s434 = scalar_lea.vmem [#allocation2], 12
          %435 = vst.msk [vmem:[%s434] sm:$0xf] %vm404, %v432
          %436 = vrot.lane.b32.xlu0 %v403, 72
          %v437 = vpop.permute.xlu0 %436
          %s439 = scalar_lea.vmem [#allocation3], 12
          %440 = vst.msk [vmem:[%s439] sm:$0xf] %vm404, %v437
        $region68: #{tpu_custom_call.1} parent=47 // pred_fallthru
          _
        %s441 = smul.u32 %s31, 8
        %s442 = sshra.s32 %s441, 3
        %s443 = sand.u32 %s441, 7
        %s444 = smul.addr %s442, 4
        %s445 = scalar_lea.vmem %s313, %s444 [#allocation4]
        %v446 = vld [vmem:[%s445] sm:$0xf]
        %v447 = vld [vmem:[#allocation7] sm:$0xf]
        %v448 = vld [vmem:[#allocation7 + $0x4] sm:$0xf]
        %v449 = vld [vmem:[#allocation7 + $0x8] sm:$0xf]
        %v450 = vld [vmem:[#allocation7 + $0xc] sm:$0xf]
        %v451 = vld [vmem:[%s2] sm:$0x1]
        %v453 = vperm.slane %v451, 0
        %v459 = vunpack.c.l.b16 %v447
        %v460 = vunpack.c.l.b16 %v448
        %v461 = vunpack.c.l.b16 %v449
        %v462 = vunpack.c.l.b16 %v450
        %v463 = vpack.c.b16 %v460, %v459
        %v464 = vpack.c.b16 %v462, %v461
        %vm467 = vcmask 261120
        %v469 = vsel %vm467, %v446, 0
        %471 = vmatpush.bf16.msra.mxu0 0
        %472 = vmatpush.bf16.msra.mxu0 0
        %473 = vmatpush.bf16.msra.mxu0 0
        %474 = vmatpush.bf16.msra.mxu0 0
        %475 = vmatpush.bf16.msra.mxu0 0
        %476 = vmatpush.bf16.msra.mxu0 0
        %477 = vmatpush.bf16.msra.mxu0 %v464
        %478 = vmatpush.bf16.msra.mxu0 %v463
        %479 = vmatmul.bf16.gmra.mxu0 %v469
        %v480 = vpop.f32.mrf.mxu0
        %v481 = vadd.f32 %v453, %v480
        %v482 = vpop.f32.mrf.mxu0
        %483 = vdwg.mxu0
        %v484 = vlaneseq
        %v485 = vshrl.u32 %v484, 7
        %v486 = vlaneseq
        %v487 = vand.u32 %v486, 127
        %vm488 = vcmp.le.s32.totalorder %v487, %v485
        %v489 = vmul.f32 %v481, 0.35355338
        %v490 = vpack.c.bf16 %v489, %v489
        %s491 = sadd.s32 %s31, 1
        // While loop
        $region69: #{tpu_custom_call.1} parent=47 // loop_pre_header
          _
        $region70: #{tpu_custom_call.1} parent=47 // loop_header
          %s493 = sphi 0, %s495
          %p494 = scmp.ge.s32.totalorder %s493, %s491
          %v498 = vphi -1e+30, %v539
          %v499 = vphi 0.0, %v550
          %v500 = vphi 0.0, %v573
        $region71: #{tpu_custom_call.1} parent=47 // loop_header_branch
          %497 = sbr.rel (%p494) target = $region75
        $region72: #{tpu_custom_call.1} parent=47 // loop_body
          %s501 = smul.u32 %s493, 8
          %s502 = sshra.s32 %s501, 3
          %s503 = sand.u32 %s501, 7
          %s504 = smul.addr %s502, 4
          %s505 = scalar_lea.vmem [#allocation2], %s504
          %v506 = vld [vmem:[%s505] sm:$0xf]
          %s507 = smul.addr %s502, 4
          %s508 = scalar_lea.vmem [#allocation3], %s507
          %v509 = vld [vmem:[%s508] sm:$0xf]
          %vm510 = vcmask 64512
          %v512 = vsel %vm510, %v490, 0
          %v515 = vsel %vm510, %v506, 0
          %517 = vmatpush.bf16.xpose.msra.mxu0 0
          %518 = vmatpush.bf16.xpose.msra.mxu0 0
          %519 = vmatpush.bf16.xpose.msra.mxu0 0
          %520 = vmatpush.bf16.xpose.msra.mxu0 0
          %521 = vmatpush.bf16.xpose.msra.mxu0 0
          %522 = vmatpush.bf16.xpose.msra.mxu0 0
          %523 = vmatpush.bf16.xpose.msra.mxu0 0
          %524 = vmatpush.bf16.xpose.msra.mxu0 %v515
          %525 = vmatmul.bf16.gmra.mxu0 %v512
          %v526 = vpop.f32.mrf.mxu0
          %v527 = vadd.f32 0.0, %v526
          %v528 = vpop.f32.mrf.mxu0
          %529 = vdwg.mxu0
          %p530 = scmp.lt.s32.totalorder %s493, %s31
          %s531 = scalar_select %p530, 1, 0
          %v532 = vstv %s531
          %vm533 = vcmp.eq.s32.totalorder %v532, 1
          %vm534 = vmor %vm533, %vm488
          %v535 = vsel %vm534, %v527, -1e+30
          %v536 = vsel %vm510, %v535, -inf
          %537 = vmax.xlane.f32.xlu0 %v536
          %v538 = vpop.xlane.xlu0 %537
          %v539 = vmax.f32 %v498, %v538
          %v540 = vsub.f32 %v498, %v539
          %v541 = vmul.f32 %v540, 1.442695
          %v542 = vpow.pop %v541
          %v543 = vsub.f32 %v535, %v539
          %v544 = vmul.f32 %v543, 1.442695
          %v545 = vpow.pop %v544
          %v546 = vmul.f32 %v542, %v499
          %v547 = vsel %vm510, %v545, 0.0
          %548 = vadd.xlane.f32.xlu0 %v547
          %v549 = vpop.xlane.xlu0 %548
          %v550 = vadd.f32 %v546, %v549
          %v551 = vmul.f32 %v542, %v500
          %v552 = vpack.c.bf16 %v545, %v545
          %v554 = vsel %vm510, %v552, 0
          %vm556 = vcmask 1043456
          %v558 = vsel %vm556, %v509, 0
          %560 = vmatpush.bf16.msra.mxu0 0
          %561 = vmatpush.bf16.msra.mxu0 0
          %562 = vmatpush.bf16.msra.mxu0 0
          %563 = vmatpush.bf16.msra.mxu0 0
          %564 = vmatpush.bf16.msra.mxu0 0
          %565 = vmatpush.bf16.msra.mxu0 0
          %566 = vmatpush.bf16.msra.mxu0 0
          %567 = vmatpush.bf16.msra.mxu0 %v558
          %568 = vmatmul.bf16.gmra.mxu0 %v554
          %v569 = vpop.f32.mrf.mxu0
          %v570 = vadd.f32 0.0, %v569
          %v571 = vpop.f32.mrf.mxu0
          %572 = vdwg.mxu0
          %v573 = vadd.f32 %v551, %v570
        $region73: #{tpu_custom_call.1} parent=47 // loop_footer
          %s495 = sadd.s32 %s493, 1
        $region74: #{tpu_custom_call.1} parent=47 // loop_footer_branch
          %492 = sbr.rel target = $region70
        $region75: #{tpu_custom_call.1} parent=47 // loop_exit
          _
        %v574 = vrcp.pop %v499
        %v575 = vmul.f32 %v500, %v574
        %v576 = vpack.c.bf16 %v575, %v575
        %v577 = vld [vmem:[#allocation10] sm:$0xf]
        // While loop
        $region76: #{tpu_custom_call.1} parent=47 // loop_pre_header
          _
        $region77: #{tpu_custom_call.1} parent=47 // loop_header
          %s579 = sphi 0, %s581
          %p580 = scmp.ge.s32.totalorder %s579, %s491
          %v584 = vphi -1e+30, %v629
          %v585 = vphi 0.0, %v640
          %v586 = vphi 0.0, %v663
        $region78: #{tpu_custom_call.1} parent=47 // loop_header_branch
          %583 = sbr.rel (%p580) target = $region82
        $region79: #{tpu_custom_call.1} parent=47 // loop_body
          %s587 = smul.u32 %s579, 8
          %s588 = sshra.s32 %s587, 3
          %s589 = sand.u32 %s587, 7
          %s590 = sadd.s32 %s588, 1
          %s591 = smul.addr %s590, 4
          %s592 = scalar_lea.vmem [#allocation2], %s591
          %v593 = vld [vmem:[%s592] sm:$0xf]
          %s594 = smul.addr %s590, 4
          %s595 = scalar_lea.vmem [#allocation3], %s594
          %v596 = vld [vmem:[%s595] sm:$0xf]
          %598 = vrot.lane.b32.xlu0 %v490, 120
          %v599 = vpop.permute.xlu0 %598
          %vm600 = vcmask 64512
          %v602 = vsel %vm600, %v599, 0
          %v605 = vsel %vm600, %v593, 0
          %607 = vmatpush.bf16.xpose.msra.mxu0 0
          %608 = vmatpush.bf16.xpose.msra.mxu0 0
          %609 = vmatpush.bf16.xpose.msra.mxu0 0
          %610 = vmatpush.bf16.xpose.msra.mxu0 0
          %611 = vmatpush.bf16.xpose.msra.mxu0 0
          %612 = vmatpush.bf16.xpose.msra.mxu0 0
          %613 = vmatpush.bf16.xpose.msra.mxu0 0
          %614 = vmatpush.bf16.xpose.msra.mxu0 %v605
          %615 = vmatmul.bf16.gmra.mxu0 %v602
          %v616 = vpop.f32.mrf.mxu0
          %v617 = vadd.f32 0.0, %v616
          %v618 = vpop.f32.mrf.mxu0
          %619 = vdwg.mxu0
          %p620 = scmp.lt.s32.totalorder %s579, %s31
          %s621 = scalar_select %p620, 1, 0
          %v622 = vstv %s621
          %vm623 = vcmp.eq.s32.totalorder %v622, 1
          %vm624 = vmor %vm623, %vm488
          %v625 = vsel %vm624, %v617, -1e+30
          %v626 = vsel %vm600, %v625, -inf
          %627 = vmax.xlane.f32.xlu0 %v626
          %v628 = vpop.xlane.xlu0 %627
          %v629 = vmax.f32 %v584, %v628
          %v630 = vsub.f32 %v584, %v629
          %v631 = vmul.f32 %v630, 1.442695
          %v632 = vpow.pop %v631
          %v633 = vsub.f32 %v625, %v629
          %v634 = vmul.f32 %v633, 1.442695
          %v635 = vpow.pop %v634
          %v636 = vmul.f32 %v632, %v585
          %v637 = vsel %vm600, %v635, 0.0
          %638 = vadd.xlane.f32.xlu0 %v637
          %v639 = vpop.xlane.xlu0 %638
          %v640 = vadd.f32 %v636, %v639
          %v641 = vmul.f32 %v632, %v586
          %v642 = vpack.c.bf16 %v635, %v635
          %v644 = vsel %vm600, %v642, 0
          %vm646 = vcmask 1043456
          %v648 = vsel %vm646, %v596, 0
          %650 = vmatpush.bf16.msra.mxu0 0
          %651 = vmatpush.bf16.msra.mxu0 0
          %652 = vmatpush.bf16.msra.mxu0 0
          %653 = vmatpush.bf16.msra.mxu0 0
          %654 = vmatpush.bf16.msra.mxu0 0
          %655 = vmatpush.bf16.msra.mxu0 0
          %656 = vmatpush.bf16.msra.mxu0 0
          %657 = vmatpush.bf16.msra.mxu0 %v648
          %658 = vmatmul.bf16.gmra.mxu0 %v644
          %v659 = vpop.f32.mrf.mxu0
          %v660 = vadd.f32 0.0, %v659
          %v661 = vpop.f32.mrf.mxu0
          %662 = vdwg.mxu0
          %v663 = vadd.f32 %v641, %v660
        $region80: #{tpu_custom_call.1} parent=47 // loop_footer
          %s581 = sadd.s32 %s579, 1
        $region81: #{tpu_custom_call.1} parent=47 // loop_footer_branch
          %578 = sbr.rel target = $region77
        $region82: #{tpu_custom_call.1} parent=47 // loop_exit
          _
        %v664 = vrcp.pop %v585
        %v665 = vmul.f32 %v586, %v664
        %v666 = vpack.c.bf16 %v665, %v665
        %s667 = scalar_lea.vmem [#allocation10], 4
        %v668 = vld [vmem:[%s667] sm:$0xf]
        %vm669 = vcmask 64512
        %v671 = vsel %vm669, %v666, 0
        %vm673 = vcmask 1043456
        %v675 = vsel %vm673, %v668, 0
        %677 = vmatpush.bf16.msra.mxu0 0
        %678 = vmatpush.bf16.msra.mxu0 0
        %679 = vmatpush.bf16.msra.mxu0 0
        %680 = vmatpush.bf16.msra.mxu0 0
        %681 = vmatpush.bf16.msra.mxu0 0
        %682 = vmatpush.bf16.msra.mxu0 0
        %683 = vmatpush.bf16.msra.mxu0 0
        %684 = vmatpush.bf16.msra.mxu0 %v675
        %685 = vmatmul.bf16.gmra.mxu0 %v671
        %v686 = vpop.f32.mrf.mxu0
        %v687 = vadd.f32 0.0, %v686
        %v688 = vpop.f32.mrf.mxu0
        %689 = vdwg.mxu0
        %v691 = vsel %vm669, %v576, 0
        %v694 = vsel %vm673, %v577, 0
        %696 = vmatpush.bf16.msra.mxu0 0
        %697 = vmatpush.bf16.msra.mxu0 0
        %698 = vmatpush.bf16.msra.mxu0 0
        %699 = vmatpush.bf16.msra.mxu0 0
        %700 = vmatpush.bf16.msra.mxu0 0
        %701 = vmatpush.bf16.msra.mxu0 0
        %702 = vmatpush.bf16.msra.mxu0 0
        %703 = vmatpush.bf16.msra.mxu0 %v694
        %704 = vmatmul.bf16.gmra.mxu0 %v691
        %v705 = vpop.f32.mrf.mxu0
        %v706 = vadd.f32 %v687, %v705
        %v707 = vpop.f32.mrf.mxu0
        %708 = vdwg.mxu0
        // While loop
        $region83: #{tpu_custom_call.1} parent=47 // loop_pre_header
          _
        $region84: #{tpu_custom_call.1} parent=47 // loop_header
          %s710 = sphi 0, %s712
          %p711 = scmp.ge.s32.totalorder %s710, %s491
          %v715 = vphi -1e+30, %v759
          %v716 = vphi 0.0, %v770
          %v717 = vphi 0.0, %v792
        $region85: #{tpu_custom_call.1} parent=47 // loop_header_branch
          %714 = sbr.rel (%p711) target = $region89
        $region86: #{tpu_custom_call.1} parent=47 // loop_body
          %s718 = smul.u32 %s710, 8
          %s719 = sshra.s32 %s718, 3
          %s720 = sand.u32 %s718, 7
          %s721 = sadd.s32 %s719, 2
          %s722 = smul.addr %s721, 4
          %s723 = scalar_lea.vmem [#allocation2], %s722
          %v724 = vld [vmem:[%s723] sm:$0xf]
          %s725 = smul.addr %s721, 4
          %s726 = scalar_lea.vmem [#allocation3], %s725
          %v727 = vld [vmem:[%s726] sm:$0xf]
          %729 = vrot.lane.b32.xlu0 %v490, 112
          %v730 = vpop.permute.xlu0 %729
          %v732 = vsel %vm669, %v730, 0
          %v735 = vsel %vm669, %v724, 0
          %737 = vmatpush.bf16.xpose.msra.mxu0 0
          %738 = vmatpush.bf16.xpose.msra.mxu0 0
          %739 = vmatpush.bf16.xpose.msra.mxu0 0
          %740 = vmatpush.bf16.xpose.msra.mxu0 0
          %741 = vmatpush.bf16.xpose.msra.mxu0 0
          %742 = vmatpush.bf16.xpose.msra.mxu0 0
          %743 = vmatpush.bf16.xpose.msra.mxu0 0
          %744 = vmatpush.bf16.xpose.msra.mxu0 %v735
          %745 = vmatmul.bf16.gmra.mxu0 %v732
          %v746 = vpop.f32.mrf.mxu0
          %v747 = vadd.f32 0.0, %v746
          %v748 = vpop.f32.mrf.mxu0
          %749 = vdwg.mxu0
          %p750 = scmp.lt.s32.totalorder %s710, %s31
          %s751 = scalar_select %p750, 1, 0
          %v752 = vstv %s751
          %vm753 = vcmp.eq.s32.totalorder %v752, 1
          %vm754 = vmor %vm753, %vm488
          %v755 = vsel %vm754, %v747, -1e+30
          %v756 = vsel %vm669, %v755, -inf
          %757 = vmax.xlane.f32.xlu0 %v756
          %v758 = vpop.xlane.xlu0 %757
          %v759 = vmax.f32 %v715, %v758
          %v760 = vsub.f32 %v715, %v759
          %v761 = vmul.f32 %v760, 1.442695
          %v762 = vpow.pop %v761
          %v763 = vsub.f32 %v755, %v759
          %v764 = vmul.f32 %v763, 1.442695
          %v765 = vpow.pop %v764
          %v766 = vmul.f32 %v762, %v716
          %v767 = vsel %vm669, %v765, 0.0
          %768 = vadd.xlane.f32.xlu0 %v767
          %v769 = vpop.xlane.xlu0 %768
          %v770 = vadd.f32 %v766, %v769
          %v771 = vmul.f32 %v762, %v717
          %v772 = vpack.c.bf16 %v765, %v765
          %v774 = vsel %vm669, %v772, 0
          %v777 = vsel %vm673, %v727, 0
          %779 = vmatpush.bf16.msra.mxu0 0
          %780 = vmatpush.bf16.msra.mxu0 0
          %781 = vmatpush.bf16.msra.mxu0 0
          %782 = vmatpush.bf16.msra.mxu0 0
          %783 = vmatpush.bf16.msra.mxu0 0
          %784 = vmatpush.bf16.msra.mxu0 0
          %785 = vmatpush.bf16.msra.mxu0 0
          %786 = vmatpush.bf16.msra.mxu0 %v777
          %787 = vmatmul.bf16.gmra.mxu0 %v774
          %v788 = vpop.f32.mrf.mxu0
          %v789 = vadd.f32 0.0, %v788
          %v790 = vpop.f32.mrf.mxu0
          %791 = vdwg.mxu0
          %v792 = vadd.f32 %v771, %v789
        $region87: #{tpu_custom_call.1} parent=47 // loop_footer
          %s712 = sadd.s32 %s710, 1
        $region88: #{tpu_custom_call.1} parent=47 // loop_footer_branch
          %709 = sbr.rel target = $region84
        $region89: #{tpu_custom_call.1} parent=47 // loop_exit
          _
        %v793 = vrcp.pop %v716
        %v794 = vmul.f32 %v717, %v793
        %v795 = vpack.c.bf16 %v794, %v794
        %s796 = scalar_lea.vmem [#allocation10], 8
        %v797 = vld [vmem:[%s796] sm:$0xf]
        %v799 = vsel %vm669, %v795, 0
        %v802 = vsel %vm673, %v797, 0
        %804 = vmatpush.bf16.msra.mxu0 0
        %805 = vmatpush.bf16.msra.mxu0 0
        %806 = vmatpush.bf16.msra.mxu0 0
        %807 = vmatpush.bf16.msra.mxu0 0
        %808 = vmatpush.bf16.msra.mxu0 0
        %809 = vmatpush.bf16.msra.mxu0 0
        %810 = vmatpush.bf16.msra.mxu0 0
        %811 = vmatpush.bf16.msra.mxu0 %v802
        %812 = vmatmul.bf16.gmra.mxu0 %v799
        %v813 = vpop.f32.mrf.mxu0
        %v814 = vadd.f32 0.0, %v813
        %v815 = vpop.f32.mrf.mxu0
        %816 = vdwg.mxu0
        %v817 = vadd.f32 %v706, %v814
        // While loop
        $region90: #{tpu_custom_call.1} parent=47 // loop_pre_header
          _
        $region91: #{tpu_custom_call.1} parent=47 // loop_header
          %s819 = sphi 0, %s821
          %p820 = scmp.ge.s32.totalorder %s819, %s491
          %v824 = vphi -1e+30, %v868
          %v825 = vphi 0.0, %v879
          %v826 = vphi 0.0, %v901
        $region92: #{tpu_custom_call.1} parent=47 // loop_header_branch
          %823 = sbr.rel (%p820) target = $region96
        $region93: #{tpu_custom_call.1} parent=47 // loop_body
          %s827 = smul.u32 %s819, 8
          %s828 = sshra.s32 %s827, 3
          %s829 = sand.u32 %s827, 7
          %s830 = sadd.s32 %s828, 3
          %s831 = smul.addr %s830, 4
          %s832 = scalar_lea.vmem [#allocation2], %s831
          %v833 = vld [vmem:[%s832] sm:$0xf]
          %s834 = smul.addr %s830, 4
          %s835 = scalar_lea.vmem [#allocation3], %s834
          %v836 = vld [vmem:[%s835] sm:$0xf]
          %838 = vrot.lane.b32.xlu0 %v490, 104
          %v839 = vpop.permute.xlu0 %838
          %v841 = vsel %vm669, %v839, 0
          %v844 = vsel %vm669, %v833, 0
          %846 = vmatpush.bf16.xpose.msra.mxu0 0
          %847 = vmatpush.bf16.xpose.msra.mxu0 0
          %848 = vmatpush.bf16.xpose.msra.mxu0 0
          %849 = vmatpush.bf16.xpose.msra.mxu0 0
          %850 = vmatpush.bf16.xpose.msra.mxu0 0
          %851 = vmatpush.bf16.xpose.msra.mxu0 0
          %852 = vmatpush.bf16.xpose.msra.mxu0 0
          %853 = vmatpush.bf16.xpose.msra.mxu0 %v844
          %854 = vmatmul.bf16.gmra.mxu0 %v841
          %v855 = vpop.f32.mrf.mxu0
          %v856 = vadd.f32 0.0, %v855
          %v857 = vpop.f32.mrf.mxu0
          %858 = vdwg.mxu0
          %p859 = scmp.lt.s32.totalorder %s819, %s31
          %s860 = scalar_select %p859, 1, 0
          %v861 = vstv %s860
          %vm862 = vcmp.eq.s32.totalorder %v861, 1
          %vm863 = vmor %vm862, %vm488
          %v864 = vsel %vm863, %v856, -1e+30
          %v865 = vsel %vm669, %v864, -inf
          %866 = vmax.xlane.f32.xlu0 %v865
          %v867 = vpop.xlane.xlu0 %866
          %v868 = vmax.f32 %v824, %v867
          %v869 = vsub.f32 %v824, %v868
          %v870 = vmul.f32 %v869, 1.442695
          %v871 = vpow.pop %v870
          %v872 = vsub.f32 %v864, %v868
          %v873 = vmul.f32 %v872, 1.442695
          %v874 = vpow.pop %v873
          %v875 = vmul.f32 %v871, %v825
          %v876 = vsel %vm669, %v874, 0.0
          %877 = vadd.xlane.f32.xlu0 %v876
          %v878 = vpop.xlane.xlu0 %877
          %v879 = vadd.f32 %v875, %v878
          %v880 = vmul.f32 %v871, %v826
          %v881 = vpack.c.bf16 %v874, %v874
          %v883 = vsel %vm669, %v881, 0
          %v886 = vsel %vm673, %v836, 0
          %888 = vmatpush.bf16.msra.mxu0 0
          %889 = vmatpush.bf16.msra.mxu0 0
          %890 = vmatpush.bf16.msra.mxu0 0
          %891 = vmatpush.bf16.msra.mxu0 0
          %892 = vmatpush.bf16.msra.mxu0 0
          %893 = vmatpush.bf16.msra.mxu0 0
          %894 = vmatpush.bf16.msra.mxu0 0
          %895 = vmatpush.bf16.msra.mxu0 %v886
          %896 = vmatmul.bf16.gmra.mxu0 %v883
          %v897 = vpop.f32.mrf.mxu0
          %v898 = vadd.f32 0.0, %v897
          %v899 = vpop.f32.mrf.mxu0
          %900 = vdwg.mxu0
          %v901 = vadd.f32 %v880, %v898
        $region94: #{tpu_custom_call.1} parent=47 // loop_footer
          %s821 = sadd.s32 %s819, 1
        $region95: #{tpu_custom_call.1} parent=47 // loop_footer_branch
          %818 = sbr.rel target = $region91
        $region96: #{tpu_custom_call.1} parent=47 // loop_exit
          _
        %v902 = vrcp.pop %v825
        %v903 = vmul.f32 %v826, %v902
        %v904 = vpack.c.bf16 %v903, %v903
        %s905 = scalar_lea.vmem [#allocation10], 12
        %v906 = vld [vmem:[%s905] sm:$0xf]
        %v908 = vsel %vm669, %v904, 0
        %v911 = vsel %vm673, %v906, 0
        %913 = vmatpush.bf16.msra.mxu0 0
        %914 = vmatpush.bf16.msra.mxu0 0
        %915 = vmatpush.bf16.msra.mxu0 0
        %916 = vmatpush.bf16.msra.mxu0 0
        %917 = vmatpush.bf16.msra.mxu0 0
        %918 = vmatpush.bf16.msra.mxu0 0
        %919 = vmatpush.bf16.msra.mxu0 0
        %920 = vmatpush.bf16.msra.mxu0 %v911
        %921 = vmatmul.bf16.gmra.mxu0 %v908
        %v922 = vpop.f32.mrf.mxu0
        %v923 = vadd.f32 0.0, %v922
        %v924 = vpop.f32.mrf.mxu0
        %925 = vdwg.mxu0
        %v926 = vadd.f32 %v817, %v923
        %v927 = vld [vmem:[%s6] sm:$0x1]
        %v929 = vperm.slane %v927, 0
        %v931 = vadd.f32 %v926, %v929
        %932 = vst.msk [vmem:[%s359] sm:$0xff] %vm467, %v931
        %s933 = sand.u32 %s200, 1
        %s934 = scalar_lea.sflag [#allocation6], %s933
        %s935 = sand.u32 %s200, 1
        %s936 = smul.addr %s935, 8
        %s937 = scalar_lea.vmem [#allocation12], %s936
        // Predicated region
        $region97: #{tpu_custom_call.1} parent=47 // pred_check
          %p938 = pneg %p210
        $region98: #{tpu_custom_call.1} parent=47 // pred_check_branch
          %940 = sbr.rel (%p938) target = $region100
        $region99: #{tpu_custom_call.1} parent=47 // pred_region
          %942 = vsyncadd %s934, 0
          %s943 = sadd.s32 %s31, %s30
          %s944 = smul.addr %s943, 8
          %s945 = scalar_lea.hbm %s7, %s944
          %s947 = sshll.u32 %s937, 4
          %s948 = int_to_ptr.vmem [resolvable:$true] %s947
          %s949 = sshll.u32 %s945, 4
          %s950 = int_to_ptr.hbm [resolvable:$true] %s949
          %952 = dma.vmem_to_hbm [thread:$0]  %s948, 128, %s950, %s934
        $region100: #{tpu_custom_call.1} parent=47 // pred_fallthru
          _
      $region48: #{tpu_custom_call.1} parent=5 // pred_fallthru
        _
      %p953 = scmp.le.s32.totalorder 2, %s21
      // Predicated region
      $region101: #{tpu_custom_call.1} parent=5 // pred_check
        %p954 = pneg %p953
      $region102: #{tpu_custom_call.1} parent=5 // pred_check_branch
        %956 = sbr.rel (%p954) target = $region104
      $region103: #{tpu_custom_call.1} parent=5 // pred_region
        %s957 = ssub.s32 %s21, 2
        // Predicated region
        $region105: #{tpu_custom_call.1} parent=103 // pred_check
          %p958 = pneg %p216
        $region106: #{tpu_custom_call.1} parent=103 // pred_check_branch
          %960 = sbr.rel (%p958) target = $region108
        $region107: #{tpu_custom_call.1} parent=103 // pred_region
          %s961 = sand.u32 %s201, 1
          %s962 = scalar_lea.sflag [#allocation6], %s961
          %s963 = sand.u32 %s201, 1
          %s964 = smul.addr %s963, 8
          %s965 = scalar_lea.vmem [#allocation12], %s964
          %967 = dma.done %s962, 128
        $region108: #{tpu_custom_call.1} parent=103 // pred_fallthru
          _
      $region104: #{tpu_custom_call.1} parent=5 // pred_fallthru
        _
    $region6: #{tpu_custom_call.1} parent=1 // loop_footer
      %s25 = sadd.s32 1, %s21
    $region7: #{tpu_custom_call.1} parent=1 // loop_footer_branch
      %20 = sbr.rel target = $region3
    $region8: #{tpu_custom_call.1} parent=1 // loop_exit
      _
    %968 = vsyncpa [#allocation5], 1
    %s969 = scalar_lea.sflag [#allocation5], 1
    %970 = vsyncpa %s969, 1
    %971 = vsyncpa [#allocation8], 1
    %972 = vsyncpa [#allocation11], 1
    %973 = vsyncpa [#allocation6], 1
    %s974 = scalar_lea.sflag [#allocation6], 1
    %975 = vsyncpa %s974, 1

</llo_original>
